<compile_context>
chip_gen: v5e
topology: v5e:2x2
jax: 0.10.0
libtpu: 0.0.40
codegen_flags: <defaults>
</compile_context>

<pallas_src>
import functools

import numpy as np
import jax
import jax.numpy as jnp
from jax.experimental import pallas as pl
from jax.experimental.pallas import tpu as pltpu

NCOIL = 15  # hard-coded in the PyTorch module: ParallelComplexInstanceNorm(15)


# ----------------------------------------------------------------------------
# fused kernel factory:
#   t==0: normalize -> stage per-tile halo windows (VMEM scratch)
#   each t: bf16 im2col slab -> one K=9*2CP MXU matmul -> unnormalize
# ----------------------------------------------------------------------------
def _make_fused_kernel(W, CP, HW, TILE, HALO, n_tiles):
    C2 = 2 * CP
    SUPW = TILE + 2 * HALO   # tile + left/right halo (zero-filled at image edges)

    def kernel(x_ref, p_ref, w_ref, b_ref, m_ref, o_ref, a_ref, col_ref):
        # x_ref  : [1, 2, CP, HW]   f32, re block / im block, lane-dense spatial
        # p_ref  : [1, CP, 8]       f32 [mre, mim, cxx, cxy, cyx, cyy, 0, 0]
        # w_ref  : [2CP, 9*2CP]     bf16 conv weight, K = tap*2CP + group*CP + coil
        # b_ref  : [2CP, 1]         f32 bias
        # m_ref  : [16, TILE]       f32 per-tap column-validity masks (rows 0..8)
        # o_ref  : [1, 2, CP, TILE] f32 output tile
        # a_ref  : [n_tiles, 2CP, SUPW] f32 scratch: normalized halo windows
        # col_ref: [9*2CP, TILE]    bf16 scratch: im2col slab for this tile
        t = pl.program_id(1)

        # ---- per-batch phase (t == 0): normalize + stage halo windows ----
        @pl.when(t == 0)
        def _():
            p = p_ref[0, :, :]                          # [CP, 8]
            mre, mim = p[:, 0:1], p[:, 1:2]
            cxx, cxy = p[:, 2:3], p[:, 3:4]
            cyx, cyy = p[:, 4:5], p[:, 5:6]
            inv_det = 1.0 / (cxx * cyy - cxy * cyx)
            ixx, ixy = cyy * inv_det, -cxy * inv_det
            iyx, iyy = -cyx * inv_det, cxx * inv_det

            dre = x_ref[0, 0, :, :] - mre               # [CP, HW]
            dim_ = x_ref[0, 1, :, :] - mim
            nre = jnp.clip(ixx * dre + ixy * dim_, -6.0, 6.0)
            nim = jnp.clip(iyx * dre + iyy * dim_, -6.0, 6.0)

            # scatter into per-tile halo windows; out-of-image halo is zero so
            # vertical conv padding needs NO runtime row masks.
            # (all offsets/widths are static and 128-aligned)
            for s in range(n_tiles):
                lo, hi = s * TILE - HALO, s * TILE + TILE + HALO
                in_lo, in_hi = max(lo, 0), min(hi, HW)
                zl, zr = in_lo - lo, hi - in_hi
                if zl:
                    a_ref[s, :, 0:zl] = jnp.zeros((C2, zl), jnp.float32)
                if zr:
                    a_ref[s, :, SUPW - zr:SUPW] = jnp.zeros((C2, zr), jnp.float32)
                w_in = in_hi - in_lo
                a_ref[s, 0:CP, zl:zl + w_in] = nre[:, in_lo:in_hi]
                a_ref[s, CP:C2, zl:zl + w_in] = nim[:, in_lo:in_hi]

        # ---- per-tile phase ----
        sup = a_ref[t]                                  # [2CP, SUPW] f32
        masks = m_ref[...]                              # [16, TILE]  f32

        # build bf16 im2col slab [9*2CP, TILE] via lane-rolls (XLU) of the halo
        # window; only horizontal (column) boundaries need masking.
        for k in range(9):                              # 3x3 taps
            dh, dw = k // 3 - 1, k % 3 - 1
            off = dh * W + dw
            shift = (-off) % SUPW
            rolled = pltpu.roll(sup, shift, axis=1) if shift else sup
            win = rolled[:, HALO:HALO + TILE]           # aligned static slice
            if dw == 0:                                 # center column: always valid
                col_ref[k * C2:(k + 1) * C2, :] = win.astype(jnp.bfloat16)
            else:
                col_ref[k * C2:(k + 1) * C2, :] = (
                    win * masks[k:k + 1, :]).astype(jnp.bfloat16)

        # 3x3 conv as ONE MXU matmul: bf16 [2CP, 9*2CP] @ bf16 [9*2CP, TILE] -> f32
        res = jnp.dot(w_ref[...], col_ref[...],
                      preferred_element_type=jnp.float32)
        res = res + b_ref[...]                          # [2CP, 1] lane broadcast
        yre = res[:CP]                                  # aligned sublane slices
        yim = res[CP:]

        # ---- unnormalize: y = C x + mean (f32) ----
        p = p_ref[0, :, :]
        mre, mim = p[:, 0:1], p[:, 1:2]
        cxx, cxy = p[:, 2:3], p[:, 3:4]
        cyx, cyy = p[:, 4:5], p[:, 5:6]
        o_ref[0, 0, :, :] = cxx * yre + cxy * yim + mre
        o_ref[0, 1, :, :] = cyx * yre + cyy * yim + mim

    return kernel


# ----------------------------------------------------------------------------
# one-time weight relayout (hoisted out of the forward path; pure numpy)
# ----------------------------------------------------------------------------
def prepare_conv_weights(conv_w, conv_b, ncoil, cp):
    """torch Conv2d layout [Cout, Cin, 3, 3], interleaved (re, im) channels
    -> padded re-block/im-block layout, flattened to bf16 [2*cp, 9*2*cp]."""
    conv_w = np.asarray(conv_w, np.float32)
    conv_b = np.asarray(conv_b, np.float32)
    cio = 2 * ncoil
    orig_to_int = np.empty(cio, np.int32)
    for c in range(ncoil):
        for g in range(2):                  # g=0 real, g=1 imag
            orig_to_int[2 * c + g] = g * cp + c
    w_pad = np.zeros((2 * cp, 2 * cp, 3, 3), np.float32)
    w_pad[np.ix_(orig_to_int, orig_to_int)] = conv_w
    b_pad = np.zeros((2 * cp,), np.float32)
    b_pad[orig_to_int] = conv_b
    # col index = (kh*3 + kw) * 2cp + internal_in  -> matches im2col scratch rows
    w_flat = np.transpose(w_pad, (0, 2, 3, 1)).reshape(2 * cp, 9 * 2 * cp)
    return (jnp.asarray(w_flat, jnp.bfloat16),
            jnp.asarray(b_pad.reshape(2 * cp, 1), jnp.float32))


def _choose_tile_rows(H, W, max_tile_lanes):
    """Largest row-tile TH with H % TH == 0, TH*W % 128 == 0, TH*W <= max lanes."""
    best = 0
    for th in range(1, H + 1):
        if H % th == 0 and (th * W) % 128 == 0 and th * W <= max_tile_lanes:
            best = th
    return best if best else H


# ----------------------------------------------------------------------------
# full forward (one fused pallas_call, grid over (batch, row-tile))
# ----------------------------------------------------------------------------
def pcn_forward(x, mean, cov, w_flat, b_col, *, max_tile_lanes=2048):
    """
    x     : [B, nCoil, H, W, 2]   (real/imag last, matching PyTorch)
    mean  : [B, nCoil, 2]
    cov   : [B, nCoil, 2, 2]
    w_flat: bf16 [2*CP, 9*2*CP]   (from prepare_conv_weights)
    b_col : f32  [2*CP, 1]
    """
    B, C, H, W, _ = x.shape
    CP = ((C + 7) // 8) * 8
    C2 = 2 * CP
    HW = H * W
    TH = _choose_tile_rows(H, W, max_tile_lanes)
    TILE = TH * W
    n_tiles = H // TH
    HALO = ((W + 1 + 127) // 128) * 128       # covers tap offsets +-(W+1), aligned
    SUPW = TILE + 2 * HALO

    # single layout transform to lane-dense [B, 2, CP, HW] (re block, im block)
    xt = jnp.transpose(x, (0, 4, 1, 2, 3)).reshape(B, 2, C, HW)
    x_planar = jnp.pad(xt.astype(jnp.float32),
                       ((0, 0), (0, 0), (0, CP - C), (0, 0)))

    # pack per-(batch, coil) normalization params into one small VMEM array
    mre, mim = mean[..., 0], mean[..., 1]
    zeros = jnp.zeros_like(mre)
    params = jnp.stack([mre, mim,
                        cov[:, :, 0, 0], cov[:, :, 0, 1],
                        cov[:, :, 1, 0], cov[:, :, 1, 1],
                        zeros, zeros], axis=-1).astype(jnp.float32)   # [B, C, 8]
    pad_row = jnp.broadcast_to(
        jnp.array([0., 0., 1., 0., 0., 1., 0., 0.], jnp.float32),
        (B, CP - C, 8))                                 # identity cov for pad coils
    params = jnp.concatenate([params, pad_row], axis=1)  # [B, CP, 8]

    # constant per-tap column-validity masks (host-side -> no runtime // or %)
    lanes = np.arange(TILE)
    ccol = lanes % W                                    # TILE is a multiple of W
    mask_np = np.zeros((16, TILE), np.float32)
    for k in range(9):
        dwk = k % 3 - 1
        mask_np[k] = ((ccol + dwk >= 0) & (ccol + dwk < W)).astype(np.float32)
    col_mask = jnp.asarray(mask_np)

    kernel = _make_fused_kernel(W, CP, HW, TILE, HALO, n_tiles)
    out_padded = pl.pallas_call(
        kernel,
        out_shape=jax.ShapeDtypeStruct((B, 2, CP, HW), jnp.float32),
        grid_spec=pltpu.PrefetchScalarGridSpec(
            num_scalar_prefetch=0,
            grid=(B, n_tiles),
            in_specs=[
                pl.BlockSpec((1, 2, CP, HW), lambda b, t: (b, 0, 0, 0)),
                pl.BlockSpec((1, CP, 8), lambda b, t: (b, 0, 0)),
                pl.BlockSpec((C2, 9 * C2), lambda b, t: (0, 0)),
                pl.BlockSpec((C2, 1), lambda b, t: (0, 0)),
                pl.BlockSpec((16, TILE), lambda b, t: (0, 0)),
            ],
            out_specs=pl.BlockSpec((1, 2, CP, TILE), lambda b, t: (b, 0, 0, t)),
            scratch_shapes=[
                pltpu.VMEM((n_tiles, C2, SUPW), jnp.float32),   # normalized halo windows
                pltpu.VMEM((9 * C2, TILE), jnp.bfloat16),       # bf16 im2col slab
            ],
        ),
        compiler_params=pltpu.CompilerParams(
            dimension_semantics=("parallel", "arbitrary")),
    )(x_planar, params, w_flat, b_col, col_mask)

    # single layout transform back to [B, nCoil, H, W, 2]
    y = out_padded[:, :, :C].reshape(B, 2, C, H, W)
    return jnp.transpose(y, (0, 2, 3, 4, 1))


# ----------------------------------------------------------------------------
# pure-JAX reference (sanity check)
# ----------------------------------------------------------------------------
def _reference(x, mean, cov, conv_w, conv_b):
    B, C, H, W, _ = x.shape
    m = mean[:, :, None, None, :]
    cxx = cov[:, :, 0, 0][:, :, None, None]
    cxy = cov[:, :, 0, 1][:, :, None, None]
    cyx = cov[:, :, 1, 0][:, :, None, None]
    cyy = cov[:, :, 1, 1][:, :, None, None]
    det = cxx * cyy - cxy * cyx
    xm = x - m
    re, im = xm[..., 0], xm[..., 1]
    nre = (cyy * re - cxy * im) / det
    nim = (-cyx * re + cxx * im) / det
    n = jnp.clip(jnp.stack([nre, nim], axis=-1), -6.0, 6.0)
    mi = jnp.transpose(n, (0, 1, 4, 2, 3)).reshape(B, 2 * C, H, W)
    mo = jax.lax.conv_general_dilated(
        mi, conv_w, window_strides=(1, 1), padding=((1, 1), (1, 1)),
        dimension_numbers=("NCHW", "OIHW", "NCHW")) + conv_b[None, :, None, None]
    mo = jnp.transpose(mo.reshape(B, C, 2, H, W), (0, 1, 3, 4, 2))
    yre, yim = mo[..., 0], mo[..., 1]
    ure = cxx * yre + cxy * yim + m[..., 0]
    uim = cyx * yre + cyy * yim + m[..., 1]
    return jnp.stack([ure, uim], axis=-1)


if __name__ == "__main__":
    B, C, H, W = 2, NCOIL, 16, 16

    key = jax.random.PRNGKey(0)
    kx, km, kc, kw, kb = jax.random.split(key, 5)

    x = jax.random.normal(kx, (B, C, H, W, 2), jnp.float32)
    mean = 0.1 * jax.random.normal(km, (B, C, 2), jnp.float32)

    # well-conditioned per-(batch, coil) 2x2 half-covariance matrices
    pert = 0.05 * jax.random.normal(kc, (B, C, 3), jnp.float32)
    cov = jnp.stack([
        jnp.stack([1.0 + jnp.abs(pert[..., 0]), pert[..., 2]], axis=-1),
        jnp.stack([pert[..., 2], 1.0 + jnp.abs(pert[..., 1])], axis=-1),
    ], axis=-2)  # [B, C, 2, 2]

    # deterministic synthetic model weights (Conv2d(2*C, 2*C, 3, padding=1))
    Cio = 2 * C
    conv_w = 0.05 * jax.random.normal(kw, (Cio, Cio, 3, 3), jnp.float32)
    conv_b = 0.05 * jax.random.normal(kb, (Cio,), jnp.float32)

    # one-time weight relayout + bf16 cast (hoisted out of the forward path)
    CP = ((C + 7) // 8) * 8
    w_flat, b_col = prepare_conv_weights(conv_w, conv_b, C, CP)

    ref = _reference(x, mean, cov, conv_w, conv_b)

    # exercise BOTH the multi-tile path (2 row tiles of 128 lanes) and the
    # single-tile path (full 256-lane image).
    fwd_tiled = jax.jit(functools.partial(pcn_forward, max_tile_lanes=128))
    fwd_full = jax.jit(functools.partial(pcn_forward, max_tile_lanes=4096))

    out_tiled = jax.block_until_ready(fwd_tiled(x, mean, cov, w_flat, b_col))
    out_full = jax.block_until_ready(fwd_full(x, mean, cov, w_flat, b_col))

    assert out_tiled.shape == (B, C, H, W, 2)
    assert out_full.shape == (B, C, H, W, 2)
    np.testing.assert_allclose(np.asarray(out_tiled), np.asarray(ref),
                               rtol=1e-2, atol=1e-2)
    np.testing.assert_allclose(np.asarray(out_full), np.asarray(ref),
                               rtol=1e-2, atol=1e-2)

    print("KERNEL_OK")
</pallas_src>

<mosaic_0001>
module attributes {stable_mosaic.version = 11 : i64} {
  func.func @kernel(%arg0: i32, %arg1: i32, %arg2: memref<1x2x16x256xf32, #tpu.memory_space<vmem>>, %arg3: memref<1x16x8xf32, #tpu.memory_space<vmem>>, %arg4: memref<32x288xbf16, #tpu.memory_space<vmem>>, %arg5: memref<32x1xf32, #tpu.memory_space<vmem>>, %arg6: memref<16x128xf32, #tpu.memory_space<vmem>>, %arg7: memref<1x2x16x128xf32, #tpu.memory_space<vmem>>, %arg8: memref<2x32x384xf32, #tpu.memory_space<vmem>>, %arg9: memref<288x128xbf16, #tpu.memory_space<vmem>>) attributes {dimension_semantics = [#tpu.dimension_semantics<parallel>, #tpu.dimension_semantics<arbitrary>], iteration_bounds = array<i64: 2, 2>, scalar_prefetch = 0 : i64, scratch_operands = 2 : i64, tpu.core_type = #tpu.core_type<tc>, window_params = [{transform_indices = @transform_0, window_bounds = array<i64: 1, 2, 16, 256>}, {transform_indices = @transform_1, window_bounds = array<i64: 1, 16, 8>}, {pipeline_mode = #tpu.pipeline_mode<synchronous>, transform_indices = @transform_2, window_bounds = array<i64: 32, 288>}, {pipeline_mode = #tpu.pipeline_mode<synchronous>, transform_indices = @transform_3, window_bounds = array<i64: 32, 1>}, {pipeline_mode = #tpu.pipeline_mode<synchronous>, transform_indices = @transform_4, window_bounds = array<i64: 16, 128>}, {transform_indices = @transform_5, window_bounds = array<i64: 1, 2, 16, 128>}]} {
    %c0_i32 = arith.constant 0 : i32
    %0 = arith.cmpi eq, %arg1, %c0_i32 : i32
    %1 = arith.extui %0 : i1 to i32
    %c0_i32_0 = arith.constant 0 : i32
    %2 = arith.cmpi ne, %1, %c0_i32_0 : i32
    scf.if %2 {
      %c0_30 = arith.constant 0 : index
      %c0_31 = arith.constant 0 : index
      %c0_32 = arith.constant 0 : index
      %96 = vector.load %arg3[%c0_30, %c0_31, %c0_32] : memref<1x16x8xf32, #tpu.memory_space<vmem>>, vector<1x16x8xf32>
      %97 = vector.shape_cast %96 : vector<1x16x8xf32> to vector<16x8xf32>
      %98 = vector.extract_strided_slice %97 {offsets = [0, 0], sizes = [16, 1], strides = [1, 1]} : vector<16x8xf32> to vector<16x1xf32>
      %99 = vector.extract_strided_slice %97 {offsets = [0, 1], sizes = [16, 1], strides = [1, 1]} : vector<16x8xf32> to vector<16x1xf32>
      %100 = vector.extract_strided_slice %97 {offsets = [0, 2], sizes = [16, 1], strides = [1, 1]} : vector<16x8xf32> to vector<16x1xf32>
      %101 = vector.extract_strided_slice %97 {offsets = [0, 3], sizes = [16, 1], strides = [1, 1]} : vector<16x8xf32> to vector<16x1xf32>
      %102 = vector.extract_strided_slice %97 {offsets = [0, 4], sizes = [16, 1], strides = [1, 1]} : vector<16x8xf32> to vector<16x1xf32>
      %103 = vector.extract_strided_slice %97 {offsets = [0, 5], sizes = [16, 1], strides = [1, 1]} : vector<16x8xf32> to vector<16x1xf32>
      %104 = arith.mulf %100, %103 : vector<16x1xf32>
      %105 = arith.mulf %101, %102 : vector<16x1xf32>
      %106 = arith.subf %104, %105 : vector<16x1xf32>
      %cst_33 = arith.constant 1.000000e+00 : f32
      %107 = vector.broadcast %cst_33 : f32 to vector<16x1xf32>
      %108 = arith.divf %107, %106 : vector<16x1xf32>
      %109 = arith.mulf %103, %108 : vector<16x1xf32>
      %cst_34 = arith.constant 0.000000e+00 : f32
      %110 = vector.broadcast %cst_34 : f32 to vector<16x1xf32>
      %111 = arith.subf %110, %101 : vector<16x1xf32>
      %112 = arith.mulf %111, %108 : vector<16x1xf32>
      %cst_35 = arith.constant 0.000000e+00 : f32
      %113 = vector.broadcast %cst_35 : f32 to vector<16x1xf32>
      %114 = arith.subf %113, %102 : vector<16x1xf32>
      %115 = arith.mulf %114, %108 : vector<16x1xf32>
      %116 = arith.mulf %100, %108 : vector<16x1xf32>
      %c0_36 = arith.constant 0 : index
      %c0_37 = arith.constant 0 : index
      %c0_38 = arith.constant 0 : index
      %c0_39 = arith.constant 0 : index
      %117 = vector.load %arg2[%c0_36, %c0_37, %c0_38, %c0_39] : memref<1x2x16x256xf32, #tpu.memory_space<vmem>>, vector<1x1x16x256xf32>
      %118 = vector.shape_cast %117 : vector<1x1x16x256xf32> to vector<16x256xf32>
      %119 = vector.broadcast %98 : vector<16x1xf32> to vector<16x256xf32>
      %120 = arith.subf %118, %119 : vector<16x256xf32>
      %c0_40 = arith.constant 0 : index
      %c1_41 = arith.constant 1 : index
      %c0_42 = arith.constant 0 : index
      %c0_43 = arith.constant 0 : index
      %121 = vector.load %arg2[%c0_40, %c1_41, %c0_42, %c0_43] : memref<1x2x16x256xf32, #tpu.memory_space<vmem>>, vector<1x1x16x256xf32>
      %122 = vector.shape_cast %121 : vector<1x1x16x256xf32> to vector<16x256xf32>
      %123 = vector.broadcast %99 : vector<16x1xf32> to vector<16x256xf32>
      %124 = arith.subf %122, %123 : vector<16x256xf32>
      %125 = vector.broadcast %109 : vector<16x1xf32> to vector<16x256xf32>
      %126 = arith.mulf %125, %120 : vector<16x256xf32>
      %127 = vector.broadcast %112 : vector<16x1xf32> to vector<16x256xf32>
      %128 = arith.mulf %127, %124 : vector<16x256xf32>
      %129 = arith.addf %126, %128 : vector<16x256xf32>
      %cst_44 = arith.constant -6.000000e+00 : f32
      %cst_45 = arith.constant 6.000000e+00 : f32
      %130 = vector.broadcast %cst_44 : f32 to vector<16x256xf32>
      %131 = arith.maximumf %130, %129 : vector<16x256xf32>
      %132 = vector.broadcast %cst_45 : f32 to vector<16x256xf32>
      %133 = arith.minimumf %132, %131 : vector<16x256xf32>
      %134 = vector.broadcast %115 : vector<16x1xf32> to vector<16x256xf32>
      %135 = arith.mulf %134, %120 : vector<16x256xf32>
      %136 = vector.broadcast %116 : vector<16x1xf32> to vector<16x256xf32>
      %137 = arith.mulf %136, %124 : vector<16x256xf32>
      %138 = arith.addf %135, %137 : vector<16x256xf32>
      %cst_46 = arith.constant -6.000000e+00 : f32
      %cst_47 = arith.constant 6.000000e+00 : f32
      %139 = vector.broadcast %cst_46 : f32 to vector<16x256xf32>
      %140 = arith.maximumf %139, %138 : vector<16x256xf32>
      %141 = vector.broadcast %cst_47 : f32 to vector<16x256xf32>
      %142 = arith.minimumf %141, %140 : vector<16x256xf32>
      %cst_48 = arith.constant 0.000000e+00 : f32
      %143 = vector.broadcast %cst_48 : f32 to vector<32x128xf32>
      %c0_49 = arith.constant 0 : index
      %c0_50 = arith.constant 0 : index
      %c0_51 = arith.constant 0 : index
      %144 = vector.load %arg8[%c0_49, %c0_50, %c0_51] : memref<2x32x384xf32, #tpu.memory_space<vmem>>, vector<1x32x128xf32>
      %145 = vector.shape_cast %144 : vector<1x32x128xf32> to vector<32x128xf32>
      %146 = vector.shape_cast %143 : vector<32x128xf32> to vector<1x32x128xf32>
      tpu.vector_store %arg8[%c0_49, %c0_50, %c0_51], %146 {strides = array<i32>} : memref<2x32x384xf32, #tpu.memory_space<vmem>>, vector<1x32x128xf32>,
      %c0_52 = arith.constant 0 : index
      %c0_53 = arith.constant 0 : index
      %c128_54 = arith.constant 128 : index
      %147 = vector.load %arg8[%c0_52, %c0_53, %c128_54] : memref<2x32x384xf32, #tpu.memory_space<vmem>>, vector<1x16x256xf32>
      %148 = vector.shape_cast %147 : vector<1x16x256xf32> to vector<16x256xf32>
      %149 = vector.shape_cast %133 : vector<16x256xf32> to vector<1x16x256xf32>
      tpu.vector_store %arg8[%c0_52, %c0_53, %c128_54], %149 {strides = array<i32>} : memref<2x32x384xf32, #tpu.memory_space<vmem>>, vector<1x16x256xf32>,
      %c0_55 = arith.constant 0 : index
      %c16 = arith.constant 16 : index
      %c128_56 = arith.constant 128 : index
      %150 = vector.load %arg8[%c0_55, %c16, %c128_56] : memref<2x32x384xf32, #tpu.memory_space<vmem>>, vector<1x16x256xf32>
      %151 = vector.shape_cast %150 : vector<1x16x256xf32> to vector<16x256xf32>
      %152 = vector.shape_cast %142 : vector<16x256xf32> to vector<1x16x256xf32>
      tpu.vector_store %arg8[%c0_55, %c16, %c128_56], %152 {strides = array<i32>} : memref<2x32x384xf32, #tpu.memory_space<vmem>>, vector<1x16x256xf32>,
      %cst_57 = arith.constant 0.000000e+00 : f32
      %153 = vector.broadcast %cst_57 : f32 to vector<32x128xf32>
      %c1_58 = arith.constant 1 : index
      %c0_59 = arith.constant 0 : index
      %c256_60 = arith.constant 256 : index
      %154 = vector.load %arg8[%c1_58, %c0_59, %c256_60] : memref<2x32x384xf32, #tpu.memory_space<vmem>>, vector<1x32x128xf32>
      %155 = vector.shape_cast %154 : vector<1x32x128xf32> to vector<32x128xf32>
      %156 = vector.shape_cast %153 : vector<32x128xf32> to vector<1x32x128xf32>
      tpu.vector_store %arg8[%c1_58, %c0_59, %c256_60], %156 {strides = array<i32>} : memref<2x32x384xf32, #tpu.memory_space<vmem>>, vector<1x32x128xf32>,
      %c1_61 = arith.constant 1 : index
      %c0_62 = arith.constant 0 : index
      %c0_63 = arith.constant 0 : index
      %157 = vector.load %arg8[%c1_61, %c0_62, %c0_63] : memref<2x32x384xf32, #tpu.memory_space<vmem>>, vector<1x16x256xf32>
      %158 = vector.shape_cast %157 : vector<1x16x256xf32> to vector<16x256xf32>
      %159 = vector.shape_cast %133 : vector<16x256xf32> to vector<1x16x256xf32>
      tpu.vector_store %arg8[%c1_61, %c0_62, %c0_63], %159 {strides = array<i32>} : memref<2x32x384xf32, #tpu.memory_space<vmem>>, vector<1x16x256xf32>,
      %c1_64 = arith.constant 1 : index
      %c16_65 = arith.constant 16 : index
      %c0_66 = arith.constant 0 : index
      %160 = vector.load %arg8[%c1_64, %c16_65, %c0_66] : memref<2x32x384xf32, #tpu.memory_space<vmem>>, vector<1x16x256xf32>
      %161 = vector.shape_cast %160 : vector<1x16x256xf32> to vector<16x256xf32>
      %162 = vector.shape_cast %142 : vector<16x256xf32> to vector<1x16x256xf32>
      tpu.vector_store %arg8[%c1_64, %c16_65, %c0_66], %162 {strides = array<i32>} : memref<2x32x384xf32, #tpu.memory_space<vmem>>, vector<1x16x256xf32>,
    } else {
    }
    %3 = arith.index_cast %arg1 : i32 to index
    %c0 = arith.constant 0 : index
    %c0_1 = arith.constant 0 : index
    %4 = vector.load %arg8[%3, %c0, %c0_1] : memref<2x32x384xf32, #tpu.memory_space<vmem>>, vector<1x32x384xf32>
    %5 = vector.shape_cast %4 : vector<1x32x384xf32> to vector<32x384xf32>
    %c0_2 = arith.constant 0 : index
    %c0_3 = arith.constant 0 : index
    %6 = vector.load %arg6[%c0_2, %c0_3] : memref<16x128xf32, #tpu.memory_space<vmem>>, vector<16x128xf32>
    %c17_i32 = arith.constant 17 : i32
    %7 = tpu.dynamic_rotate %5 by %c17_i32 dim 1 : vector<32x384xf32>, i32 -> vector<32x384xf32>
    %8 = vector.extract_strided_slice %7 {offsets = [0, 128], sizes = [32, 128], strides = [1, 1]} : vector<32x384xf32> to vector<32x128xf32>
    %9 = vector.extract_strided_slice %6 {offsets = [0, 0], sizes = [1, 128], strides = [1, 1]} : vector<16x128xf32> to vector<1x128xf32>
    %10 = vector.broadcast %9 : vector<1x128xf32> to vector<32x128xf32>
    %11 = arith.mulf %8, %10 : vector<32x128xf32>
    %12 = arith.truncf %11 : vector<32x128xf32> to vector<32x128xbf16>
    %c0_4 = arith.constant 0 : index
    %c0_5 = arith.constant 0 : index
    %13 = vector.load %arg9[%c0_4, %c0_5] : memref<288x128xbf16, #tpu.memory_space<vmem>>, vector<32x128xbf16>
    tpu.vector_store %arg9[%c0_4, %c0_5], %12 {strides = array<i32>} : memref<288x128xbf16, #tpu.memory_space<vmem>>, vector<32x128xbf16>,
    %c16_i32 = arith.constant 16 : i32
    %14 = tpu.dynamic_rotate %5 by %c16_i32 dim 1 : vector<32x384xf32>, i32 -> vector<32x384xf32>
    %15 = vector.extract_strided_slice %14 {offsets = [0, 128], sizes = [32, 128], strides = [1, 1]} : vector<32x384xf32> to vector<32x128xf32>
    %16 = arith.truncf %15 : vector<32x128xf32> to vector<32x128xbf16>
    %c32 = arith.constant 32 : index
    %c0_6 = arith.constant 0 : index
    %17 = vector.load %arg9[%c32, %c0_6] : memref<288x128xbf16, #tpu.memory_space<vmem>>, vector<32x128xbf16>
    tpu.vector_store %arg9[%c32, %c0_6], %16 {strides = array<i32>} : memref<288x128xbf16, #tpu.memory_space<vmem>>, vector<32x128xbf16>,
    %c15_i32 = arith.constant 15 : i32
    %18 = tpu.dynamic_rotate %5 by %c15_i32 dim 1 : vector<32x384xf32>, i32 -> vector<32x384xf32>
    %19 = vector.extract_strided_slice %18 {offsets = [0, 128], sizes = [32, 128], strides = [1, 1]} : vector<32x384xf32> to vector<32x128xf32>
    %20 = vector.extract_strided_slice %6 {offsets = [2, 0], sizes = [1, 128], strides = [1, 1]} : vector<16x128xf32> to vector<1x128xf32>
    %21 = vector.broadcast %20 : vector<1x128xf32> to vector<32x128xf32>
    %22 = arith.mulf %19, %21 : vector<32x128xf32>
    %23 = arith.truncf %22 : vector<32x128xf32> to vector<32x128xbf16>
    %c64 = arith.constant 64 : index
    %c0_7 = arith.constant 0 : index
    %24 = vector.load %arg9[%c64, %c0_7] : memref<288x128xbf16, #tpu.memory_space<vmem>>, vector<32x128xbf16>
    tpu.vector_store %arg9[%c64, %c0_7], %23 {strides = array<i32>} : memref<288x128xbf16, #tpu.memory_space<vmem>>, vector<32x128xbf16>,
    %c1_i32 = arith.constant 1 : i32
    %25 = tpu.dynamic_rotate %5 by %c1_i32 dim 1 : vector<32x384xf32>, i32 -> vector<32x384xf32>
    %26 = vector.extract_strided_slice %25 {offsets = [0, 128], sizes = [32, 128], strides = [1, 1]} : vector<32x384xf32> to vector<32x128xf32>
    %27 = vector.extract_strided_slice %6 {offsets = [3, 0], sizes = [1, 128], strides = [1, 1]} : vector<16x128xf32> to vector<1x128xf32>
    %28 = vector.broadcast %27 : vector<1x128xf32> to vector<32x128xf32>
    %29 = arith.mulf %26, %28 : vector<32x128xf32>
    %30 = arith.truncf %29 : vector<32x128xf32> to vector<32x128xbf16>
    %c96 = arith.constant 96 : index
    %c0_8 = arith.constant 0 : index
    %31 = vector.load %arg9[%c96, %c0_8] : memref<288x128xbf16, #tpu.memory_space<vmem>>, vector<32x128xbf16>
    tpu.vector_store %arg9[%c96, %c0_8], %30 {strides = array<i32>} : memref<288x128xbf16, #tpu.memory_space<vmem>>, vector<32x128xbf16>,
    %32 = vector.extract_strided_slice %5 {offsets = [0, 128], sizes = [32, 128], strides = [1, 1]} : vector<32x384xf32> to vector<32x128xf32>
    %33 = arith.truncf %32 : vector<32x128xf32> to vector<32x128xbf16>
    %c128 = arith.constant 128 : index
    %c0_9 = arith.constant 0 : index
    %34 = vector.load %arg9[%c128, %c0_9] : memref<288x128xbf16, #tpu.memory_space<vmem>>, vector<32x128xbf16>
    tpu.vector_store %arg9[%c128, %c0_9], %33 {strides = array<i32>} : memref<288x128xbf16, #tpu.memory_space<vmem>>, vector<32x128xbf16>,
    %c383_i32 = arith.constant 383 : i32
    %35 = tpu.dynamic_rotate %5 by %c383_i32 dim 1 : vector<32x384xf32>, i32 -> vector<32x384xf32>
    %36 = vector.extract_strided_slice %35 {offsets = [0, 128], sizes = [32, 128], strides = [1, 1]} : vector<32x384xf32> to vector<32x128xf32>
    %37 = vector.extract_strided_slice %6 {offsets = [5, 0], sizes = [1, 128], strides = [1, 1]} : vector<16x128xf32> to vector<1x128xf32>
    %38 = vector.broadcast %37 : vector<1x128xf32> to vector<32x128xf32>
    %39 = arith.mulf %36, %38 : vector<32x128xf32>
    %40 = arith.truncf %39 : vector<32x128xf32> to vector<32x128xbf16>
    %c160 = arith.constant 160 : index
    %c0_10 = arith.constant 0 : index
    %41 = vector.load %arg9[%c160, %c0_10] : memref<288x128xbf16, #tpu.memory_space<vmem>>, vector<32x128xbf16>
    tpu.vector_store %arg9[%c160, %c0_10], %40 {strides = array<i32>} : memref<288x128xbf16, #tpu.memory_space<vmem>>, vector<32x128xbf16>,
    %c369_i32 = arith.constant 369 : i32
    %42 = tpu.dynamic_rotate %5 by %c369_i32 dim 1 : vector<32x384xf32>, i32 -> vector<32x384xf32>
    %43 = vector.extract_strided_slice %42 {offsets = [0, 128], sizes = [32, 128], strides = [1, 1]} : vector<32x384xf32> to vector<32x128xf32>
    %44 = vector.extract_strided_slice %6 {offsets = [6, 0], sizes = [1, 128], strides = [1, 1]} : vector<16x128xf32> to vector<1x128xf32>
    %45 = vector.broadcast %44 : vector<1x128xf32> to vector<32x128xf32>
    %46 = arith.mulf %43, %45 : vector<32x128xf32>
    %47 = arith.truncf %46 : vector<32x128xf32> to vector<32x128xbf16>
    %c192 = arith.constant 192 : index
    %c0_11 = arith.constant 0 : index
    %48 = vector.load %arg9[%c192, %c0_11] : memref<288x128xbf16, #tpu.memory_space<vmem>>, vector<32x128xbf16>
    tpu.vector_store %arg9[%c192, %c0_11], %47 {strides = array<i32>} : memref<288x128xbf16, #tpu.memory_space<vmem>>, vector<32x128xbf16>,
    %c368_i32 = arith.constant 368 : i32
    %49 = tpu.dynamic_rotate %5 by %c368_i32 dim 1 : vector<32x384xf32>, i32 -> vector<32x384xf32>
    %50 = vector.extract_strided_slice %49 {offsets = [0, 128], sizes = [32, 128], strides = [1, 1]} : vector<32x384xf32> to vector<32x128xf32>
    %51 = arith.truncf %50 : vector<32x128xf32> to vector<32x128xbf16>
    %c224 = arith.constant 224 : index
    %c0_12 = arith.constant 0 : index
    %52 = vector.load %arg9[%c224, %c0_12] : memref<288x128xbf16, #tpu.memory_space<vmem>>, vector<32x128xbf16>
    tpu.vector_store %arg9[%c224, %c0_12], %51 {strides = array<i32>} : memref<288x128xbf16, #tpu.memory_space<vmem>>, vector<32x128xbf16>,
    %c367_i32 = arith.constant 367 : i32
    %53 = tpu.dynamic_rotate %5 by %c367_i32 dim 1 : vector<32x384xf32>, i32 -> vector<32x384xf32>
    %54 = vector.extract_strided_slice %53 {offsets = [0, 128], sizes = [32, 128], strides = [1, 1]} : vector<32x384xf32> to vector<32x128xf32>
    %55 = vector.extract_strided_slice %6 {offsets = [8, 0], sizes = [1, 128], strides = [1, 1]} : vector<16x128xf32> to vector<1x128xf32>
    %56 = vector.broadcast %55 : vector<1x128xf32> to vector<32x128xf32>
    %57 = arith.mulf %54, %56 : vector<32x128xf32>
    %58 = arith.truncf %57 : vector<32x128xf32> to vector<32x128xbf16>
    %c256 = arith.constant 256 : index
    %c0_13 = arith.constant 0 : index
    %59 = vector.load %arg9[%c256, %c0_13] : memref<288x128xbf16, #tpu.memory_space<vmem>>, vector<32x128xbf16>
    tpu.vector_store %arg9[%c256, %c0_13], %58 {strides = array<i32>} : memref<288x128xbf16, #tpu.memory_space<vmem>>, vector<32x128xbf16>,
    %c0_14 = arith.constant 0 : index
    %c0_15 = arith.constant 0 : index
    %60 = vector.load %arg4[%c0_14, %c0_15] : memref<32x288xbf16, #tpu.memory_space<vmem>>, vector<32x288xbf16>
    %c0_16 = arith.constant 0 : index
    %c0_17 = arith.constant 0 : index
    %61 = vector.load %arg9[%c0_16, %c0_17] : memref<288x128xbf16, #tpu.memory_space<vmem>>, vector<288x128xbf16>
    %cst = arith.constant dense<0.000000e+00> : vector<32x128xf32>
    %62 = tpu.matmul %60, %61, %cst {dimension_numbers = #tpu.dot_dimension_numbers<[1], [0], [0], [1], [0, 0, 1, 1], [], []>} : vector<32x288xbf16>, vector<288x128xbf16>, vector<32x128xf32> -> vector<32x128xf32>
    %c0_18 = arith.constant 0 : index
    %c0_19 = arith.constant 0 : index
    %63 = vector.load %arg5[%c0_18, %c0_19] : memref<32x1xf32, #tpu.memory_space<vmem>>, vector<32x1xf32>
    %64 = vector.broadcast %63 : vector<32x1xf32> to vector<32x128xf32>
    %65 = arith.addf %62, %64 : vector<32x128xf32>
    %66 = vector.extract_strided_slice %65 {offsets = [0, 0], sizes = [16, 128], strides = [1, 1]} : vector<32x128xf32> to vector<16x128xf32>
    %67 = vector.extract_strided_slice %65 {offsets = [16, 0], sizes = [16, 128], strides = [1, 1]} : vector<32x128xf32> to vector<16x128xf32>
    %c0_20 = arith.constant 0 : index
    %c0_21 = arith.constant 0 : index
    %c0_22 = arith.constant 0 : index
    %68 = vector.load %arg3[%c0_20, %c0_21, %c0_22] : memref<1x16x8xf32, #tpu.memory_space<vmem>>, vector<1x16x8xf32>
    %69 = vector.shape_cast %68 : vector<1x16x8xf32> to vector<16x8xf32>
    %70 = vector.extract_strided_slice %69 {offsets = [0, 0], sizes = [16, 1], strides = [1, 1]} : vector<16x8xf32> to vector<16x1xf32>
    %71 = vector.extract_strided_slice %69 {offsets = [0, 1], sizes = [16, 1], strides = [1, 1]} : vector<16x8xf32> to vector<16x1xf32>
    %72 = vector.extract_strided_slice %69 {offsets = [0, 2], sizes = [16, 1], strides = [1, 1]} : vector<16x8xf32> to vector<16x1xf32>
    %73 = vector.extract_strided_slice %69 {offsets = [0, 3], sizes = [16, 1], strides = [1, 1]} : vector<16x8xf32> to vector<16x1xf32>
    %74 = vector.extract_strided_slice %69 {offsets = [0, 4], sizes = [16, 1], strides = [1, 1]} : vector<16x8xf32> to vector<16x1xf32>
    %75 = vector.extract_strided_slice %69 {offsets = [0, 5], sizes = [16, 1], strides = [1, 1]} : vector<16x8xf32> to vector<16x1xf32>
    %76 = vector.broadcast %72 : vector<16x1xf32> to vector<16x128xf32>
    %77 = arith.mulf %76, %66 : vector<16x128xf32>
    %78 = vector.broadcast %73 : vector<16x1xf32> to vector<16x128xf32>
    %79 = arith.mulf %78, %67 : vector<16x128xf32>
    %80 = arith.addf %77, %79 : vector<16x128xf32>
    %81 = vector.broadcast %70 : vector<16x1xf32> to vector<16x128xf32>
    %82 = arith.addf %80, %81 : vector<16x128xf32>
    %c0_23 = arith.constant 0 : index
    %c0_24 = arith.constant 0 : index
    %c0_25 = arith.constant 0 : index
    %c0_26 = arith.constant 0 : index
    %83 = vector.load %arg7[%c0_23, %c0_24, %c0_25, %c0_26] : memref<1x2x16x128xf32, #tpu.memory_space<vmem>>, vector<1x1x16x128xf32>
    %84 = vector.shape_cast %83 : vector<1x1x16x128xf32> to vector<16x128xf32>
    %85 = vector.shape_cast %82 : vector<16x128xf32> to vector<1x1x16x128xf32>
    tpu.vector_store %arg7[%c0_23, %c0_24, %c0_25, %c0_26], %85 {strides = array<i32>} : memref<1x2x16x128xf32, #tpu.memory_space<vmem>>, vector<1x1x16x128xf32>,
    %86 = vector.broadcast %74 : vector<16x1xf32> to vector<16x128xf32>
    %87 = arith.mulf %86, %66 : vector<16x128xf32>
    %88 = vector.broadcast %75 : vector<16x1xf32> to vector<16x128xf32>
    %89 = arith.mulf %88, %67 : vector<16x128xf32>
    %90 = arith.addf %87, %89 : vector<16x128xf32>
    %91 = vector.broadcast %71 : vector<16x1xf32> to vector<16x128xf32>
    %92 = arith.addf %90, %91 : vector<16x128xf32>
    %c0_27 = arith.constant 0 : index
    %c1 = arith.constant 1 : index
    %c0_28 = arith.constant 0 : index
    %c0_29 = arith.constant 0 : index
    %93 = vector.load %arg7[%c0_27, %c1, %c0_28, %c0_29] : memref<1x2x16x128xf32, #tpu.memory_space<vmem>>, vector<1x1x16x128xf32>
    %94 = vector.shape_cast %93 : vector<1x1x16x128xf32> to vector<16x128xf32>
    %95 = vector.shape_cast %92 : vector<16x128xf32> to vector<1x1x16x128xf32>
    tpu.vector_store %arg7[%c0_27, %c1, %c0_28, %c0_29], %95 {strides = array<i32>} : memref<1x2x16x128xf32, #tpu.memory_space<vmem>>, vector<1x1x16x128xf32>,
    return
  }
  func.func @transform_0(%arg0: i32, %arg1: i32) -> (i32, i32, i32, i32) {
    %c0_i32 = arith.constant 0 : i32
    %c0_i32_0 = arith.constant 0 : i32
    %c0_i32_1 = arith.constant 0 : i32
    %c0_i32_2 = arith.constant 0 : i32
    return %arg0, %c0_i32, %c0_i32_0, %c0_i32_1 : i32, i32, i32, i32
  }
  func.func @transform_1(%arg0: i32, %arg1: i32) -> (i32, i32, i32) {
    %c0_i32 = arith.constant 0 : i32
    %c0_i32_0 = arith.constant 0 : i32
    %c0_i32_1 = arith.constant 0 : i32
    return %arg0, %c0_i32, %c0_i32_0 : i32, i32, i32
  }
  func.func @transform_2(%arg0: i32, %arg1: i32) -> (i32, i32) {
    %c0_i32 = arith.constant 0 : i32
    %c0_i32_0 = arith.constant 0 : i32
    %c0_i32_1 = arith.constant 0 : i32
    return %c0_i32, %c0_i32_0 : i32, i32
  }
  func.func @transform_3(%arg0: i32, %arg1: i32) -> (i32, i32) {
    %c0_i32 = arith.constant 0 : i32
    %c0_i32_0 = arith.constant 0 : i32
    %c0_i32_1 = arith.constant 0 : i32
    return %c0_i32, %c0_i32_0 : i32, i32
  }
  func.func @transform_4(%arg0: i32, %arg1: i32) -> (i32, i32) {
    %c0_i32 = arith.constant 0 : i32
    %c0_i32_0 = arith.constant 0 : i32
    %c0_i32_1 = arith.constant 0 : i32
    return %c0_i32, %c0_i32_0 : i32, i32
  }
  func.func @transform_5(%arg0: i32, %arg1: i32) -> (i32, i32, i32, i32) {
    %c0_i32 = arith.constant 0 : i32
    %c0_i32_0 = arith.constant 0 : i32
    %c0_i32_1 = arith.constant 0 : i32
    return %arg0, %c0_i32, %c0_i32_0, %arg1 : i32, i32, i32, i32
  }
}

</mosaic_0001>

<llo_original>
// kernel: pcn_forward.1
$region0: #{pcn_forward.1}
  #allocation0 [shape = 'u32[]', space=smem, size = 0x4, offset = 0x4, fixed_abs, tag = 'smem constant byte address 0x4 - core index']
  #allocation1 [shape = 'u32[72,128]{1,0:T(1,128)}', space=vmem, size = 0x9000, scoped, tag = 'internal scratch']
  #allocation2 [shape = 'f32[2,32,384]{2,1,0:T(8,128)}', space=vmem, size = 0x18000, scoped, tag = 'scratch operand']
  #allocation3 [shape = 'bf16[288,128]{1,0:T(8,128)(2,1)}', space=vmem, size = 0x12000, scoped, tag = 'scratch operand']
  %s0 = inlined_call_operand.vmem [shape: f32[2,2,16,256], index: 0, kind: input, shape index: {}]
  %s1 = inlined_call_operand.vmem [shape: f32[2,16,8], index: 1, kind: input, shape index: {}]
  %s2 = inlined_call_operand.vmem [shape: bf16[32,288], index: 2, kind: input, shape index: {}]
  %s3 = inlined_call_operand.vmem [shape: f32[32,1], index: 3, kind: input, shape index: {}]
  %s4 = inlined_call_operand.vmem [shape: f32[16,128], index: 4, kind: input, shape index: {}]
  %s5 = inlined_call_operand.vmem [shape: f32[2,2,16,256], index: 5, kind: output, shape index: {}]
  %s6 = sld [smem:[#allocation0]]
  $region91: #{pcn_forward.1} parent=0
    _
  %s8 = ssub.s32 1, %s6
  %s9 = scalar_select 0, %s8, %s6
  $region1: #{pcn_forward.1} parent=0
    #allocation4 [shape = 'u8[32768]{0}', space=vmem, size = 0x8000, scoped, tag = 'output window, operand 0']
    loop: start=0, step=1, limit=6
    $region2: #{pcn_forward.1} parent=1 // loop_pre_header
      _
    $region3: #{pcn_forward.1} parent=1 // loop_header
      %s11 = sphi 0, %s15
      %p12 = scmp.ge.s32.totalorder %s11, 6
      %s18 = sphi 0, %s30
      %s19 = sphi 0, %s26
      %s20 = sphi 0, %s18
      %s21 = sphi 0, %s19
      %s22 = sphi 0, %s20
      %s23 = sphi 0, %s21
      %s33 = sphi 0, %s35
      %s36 = sphi 0, %s33
      %s37 = sphi 0, %s36
      %s53 = sphi 0, %s37
      %s59 = sphi 0, %s61
      %s62 = sphi 0, %s59
      %s63 = sphi 0, %s62
      %s79 = sphi 0, %s63
      %s83 = sphi 0, %s83
      %s85 = sphi 0, %s83
      %s86 = sphi 0, %s85
      %s100 = sphi 0, %s86
      %s104 = sphi 0, %s104
      %s106 = sphi 0, %s104
      %s107 = sphi 0, %s106
      %s121 = sphi 0, %s107
      %s125 = sphi 0, %s125
      %s127 = sphi 0, %s125
      %s128 = sphi 0, %s127
      %s142 = sphi 0, %s128
      %s150 = sphi 0, %s152
      %s153 = sphi 0, %s150
      %s154 = sphi 0, %s153
      %s170 = sphi 0, %s154
    $region4: #{pcn_forward.1} parent=1 // loop_header_branch
      %14 = sbr.rel (%p12) target = $region8
    $region5: #{pcn_forward.1} parent=1 // loop_body
      %s16 = ssub.s32 %s11, 1
      %s17 = ssub.s32 %s11, 2
      %s24 = sadd.s32 1, %s19
      %p25 = scmp.ge.s32.totalorder %s24, 2
      %s26 = scalar_select %p25, 0, %s24
      %s27 = sadd.s32 1, %s18
      %s28 = scalar_select %p25, %s27, %s18
      %p29 = scmp.ge.s32.totalorder %s28, 2
      %s30 = scalar_select %p29, 0, %s28
      %s31 = ssub.s32 %s18, %s30
      %p32 = scmp.eq.s32.totalorder %s31, 0
      %s34 = sadd.s32 %s33, 1
      %s35 = scalar_select %p32, %s33, %s34
      %p38 = pneg %p32
      %p39 = scmp.eq.s32.totalorder %s11, 3
      %p40 = por %p38, %p39
      %p41 = scmp.ne.s32.totalorder %s33, %s36
      %p42 = scmp.eq.s32.totalorder %s11, 0
      %p43 = por %p41, %p42
      %p44 = scmp.ne.s32.totalorder %s33, %s36
      %p45 = scmp.eq.s32.totalorder %s16, 3
      %p46 = por %p44, %p45
      %p47 = scmp.ne.s32.totalorder %s36, %s37
      %p48 = scmp.eq.s32.totalorder %s16, 0
      %p49 = por %p47, %p48
      %p50 = scmp.ne.s32.totalorder %s36, %s37
      %p51 = scmp.eq.s32.totalorder %s17, 3
      %p52 = por %p50, %p51
      %p54 = scmp.ne.s32.totalorder %s37, %s53
      %p55 = scmp.eq.s32.totalorder %s17, 0
      %p56 = por %p54, %p55
      %s57 = ssub.s32 %s18, %s30
      %p58 = scmp.eq.s32.totalorder %s57, 0
      %s60 = sadd.s32 %s59, 1
      %s61 = scalar_select %p58, %s59, %s60
      %p64 = pneg %p58
      %p65 = scmp.eq.s32.totalorder %s11, 3
      %p66 = por %p64, %p65
      %p67 = scmp.ne.s32.totalorder %s59, %s62
      %p68 = scmp.eq.s32.totalorder %s11, 0
      %p69 = por %p67, %p68
      %p70 = scmp.ne.s32.totalorder %s59, %s62
      %p71 = scmp.eq.s32.totalorder %s16, 3
      %p72 = por %p70, %p71
      %p73 = scmp.ne.s32.totalorder %s62, %s63
      %p74 = scmp.eq.s32.totalorder %s16, 0
      %p75 = por %p73, %p74
      %p76 = scmp.ne.s32.totalorder %s62, %s63
      %p77 = scmp.eq.s32.totalorder %s17, 3
      %p78 = por %p76, %p77
      %p80 = scmp.ne.s32.totalorder %s63, %s79
      %p81 = scmp.eq.s32.totalorder %s17, 0
      %p82 = por %p80, %p81
      %s84 = sadd.s32 %s83, 1
      %p87 = scmp.eq.s32.totalorder %s11, 3
      %p88 = scmp.ne.s32.totalorder %s83, %s85
      %p89 = scmp.eq.s32.totalorder %s11, 0
      %p90 = por %p88, %p89
      %p91 = scmp.ne.s32.totalorder %s83, %s85
      %p92 = scmp.eq.s32.totalorder %s16, 3
      %p93 = por %p91, %p92
      %p94 = scmp.ne.s32.totalorder %s85, %s86
      %p95 = scmp.eq.s32.totalorder %s16, 0
      %p96 = por %p94, %p95
      %p97 = scmp.ne.s32.totalorder %s85, %s86
      %p98 = scmp.eq.s32.totalorder %s17, 3
      %p99 = por %p97, %p98
      %p101 = scmp.ne.s32.totalorder %s86, %s100
      %p102 = scmp.eq.s32.totalorder %s17, 0
      %p103 = por %p101, %p102
      %s105 = sadd.s32 %s104, 1
      %p108 = scmp.eq.s32.totalorder %s11, 3
      %p109 = scmp.ne.s32.totalorder %s104, %s106
      %p110 = scmp.eq.s32.totalorder %s11, 0
      %p111 = por %p109, %p110
      %p112 = scmp.ne.s32.totalorder %s104, %s106
      %p113 = scmp.eq.s32.totalorder %s16, 3
      %p114 = por %p112, %p113
      %p115 = scmp.ne.s32.totalorder %s106, %s107
      %p116 = scmp.eq.s32.totalorder %s16, 0
      %p117 = por %p115, %p116
      %p118 = scmp.ne.s32.totalorder %s106, %s107
      %p119 = scmp.eq.s32.totalorder %s17, 3
      %p120 = por %p118, %p119
      %p122 = scmp.ne.s32.totalorder %s107, %s121
      %p123 = scmp.eq.s32.totalorder %s17, 0
      %p124 = por %p122, %p123
      %s126 = sadd.s32 %s125, 1
      %p129 = scmp.eq.s32.totalorder %s11, 3
      %p130 = scmp.ne.s32.totalorder %s125, %s127
      %p131 = scmp.eq.s32.totalorder %s11, 0
      %p132 = por %p130, %p131
      %p133 = scmp.ne.s32.totalorder %s125, %s127
      %p134 = scmp.eq.s32.totalorder %s16, 3
      %p135 = por %p133, %p134
      %p136 = scmp.ne.s32.totalorder %s127, %s128
      %p137 = scmp.eq.s32.totalorder %s16, 0
      %p138 = por %p136, %p137
      %p139 = scmp.ne.s32.totalorder %s127, %s128
      %p140 = scmp.eq.s32.totalorder %s17, 3
      %p141 = por %p139, %p140
      %p143 = scmp.ne.s32.totalorder %s128, %s142
      %p144 = scmp.eq.s32.totalorder %s17, 0
      %p145 = por %p143, %p144
      %s146 = ssub.s32 %s18, %s30
      %s147 = ssub.s32 %s19, %s26
      %s148 = sor.u32 %s146, %s147
      %p149 = scmp.eq.s32.totalorder %s148, 0
      %s151 = sadd.s32 %s150, 1
      %s152 = scalar_select %p149, %s150, %s151
      %p155 = pneg %p149
      %p156 = scmp.eq.s32.totalorder %s11, 3
      %p157 = por %p155, %p156
      %p158 = scmp.ne.s32.totalorder %s150, %s153
      %p159 = scmp.eq.s32.totalorder %s11, 0
      %p160 = por %p158, %p159
      %p161 = scmp.ne.s32.totalorder %s150, %s153
      %p162 = scmp.eq.s32.totalorder %s16, 3
      %p163 = por %p161, %p162
      %p164 = scmp.ne.s32.totalorder %s153, %s154
      %p165 = scmp.eq.s32.totalorder %s16, 0
      %p166 = por %p164, %p165
      %p167 = scmp.ne.s32.totalorder %s153, %s154
      %p168 = scmp.eq.s32.totalorder %s17, 3
      %p169 = por %p167, %p168
      %p171 = scmp.ne.s32.totalorder %s154, %s170
      %p172 = scmp.eq.s32.totalorder %s17, 0
      %p173 = por %p171, %p172
      %p174 = scmp.le.s32.totalorder 1, %s11
      %p175 = scmp.lt.s32.totalorder %s11, 5
      %p176 = pnand %p174, %p175
      %p177 = pneg %p176
      // Predicated region
      $region9: #{pcn_forward.1} parent=5 // pred_check
        _
      $region10: #{pcn_forward.1} parent=5 // pred_check_branch
        %179 = sbr.rel (%p176) target = $region12
      $region11: #{pcn_forward.1} parent=5 // pred_region
        %s180 = ssub.s32 %s11, 1
        // Predicated region
        $region13: #{pcn_forward.1} parent=11 // pred_check
          %p181 = pneg %p96
        $region14: #{pcn_forward.1} parent=11 // pred_check_branch
          %183 = sbr.rel (%p181) target = $region16
        $region15: #{pcn_forward.1} parent=11 // pred_region
          _
        $region16: #{pcn_forward.1} parent=11 // pred_fallthru
          _
        // Predicated region
        $region17: #{pcn_forward.1} parent=11 // pred_check
          %p184 = pneg %p117
        $region18: #{pcn_forward.1} parent=11 // pred_check_branch
          %186 = sbr.rel (%p184) target = $region20
        $region19: #{pcn_forward.1} parent=11 // pred_region
          _
        $region20: #{pcn_forward.1} parent=11 // pred_fallthru
          _
        // Predicated region
        $region21: #{pcn_forward.1} parent=11 // pred_check
          %p187 = pneg %p138
        $region22: #{pcn_forward.1} parent=11 // pred_check_branch
          %189 = sbr.rel (%p187) target = $region24
        $region23: #{pcn_forward.1} parent=11 // pred_region
          _
        $region24: #{pcn_forward.1} parent=11 // pred_fallthru
          _
      $region12: #{pcn_forward.1} parent=5 // pred_fallthru
        _
      %p190 = scmp.lt.s32.totalorder %s11, 4
      // Predicated region
      $region25: #{pcn_forward.1} parent=5 // pred_check
        %p191 = pneg %p190
      $region26: #{pcn_forward.1} parent=5 // pred_check_branch
        %193 = sbr.rel (%p191) target = $region28
      $region27: #{pcn_forward.1} parent=5 // pred_region
        // Predicated region
        $region29: #{pcn_forward.1} parent=27 // pred_check
          %p194 = pneg %p43
        $region30: #{pcn_forward.1} parent=27 // pred_check_branch
          %196 = sbr.rel (%p194) target = $region32
        $region31: #{pcn_forward.1} parent=27 // pred_region
          %p197 = scmp.lt.s32.totalorder %s18, 1
          %s198 = scalar_select %p197, %s18, 1
          %s199 = smul.addr %s198, 8
          %s200 = smul.addr %s199, 8
          %s201 = scalar_lea.vmem %s0, %s200
        $region32: #{pcn_forward.1} parent=27 // pred_fallthru
          _
        // Predicated region
        $region33: #{pcn_forward.1} parent=27 // pred_check
          %p202 = pneg %p69
        $region34: #{pcn_forward.1} parent=27 // pred_check_branch
          %204 = sbr.rel (%p202) target = $region36
        $region35: #{pcn_forward.1} parent=27 // pred_region
          %p205 = scmp.lt.s32.totalorder %s18, 1
          %s206 = scalar_select %p205, %s18, 1
          %s207 = smul.addr %s206, 2
          %s208 = smul.addr %s207, 8
          %s209 = scalar_lea.vmem %s1, %s208
        $region36: #{pcn_forward.1} parent=27 // pred_fallthru
          _
      $region28: #{pcn_forward.1} parent=5 // pred_fallthru
        _
      %p210 = scmp.le.s32.totalorder 1, %s11
      %p211 = scmp.lt.s32.totalorder %s11, 5
      %p212 = pnand %p210, %p211
      %p213 = pneg %p212
      // Predicated region
      $region37: #{pcn_forward.1} parent=5 // pred_check
        _
      $region38: #{pcn_forward.1} parent=5 // pred_check_branch
        %215 = sbr.rel (%p212) target = $region40
      $region39: #{pcn_forward.1} parent=5 // pred_region
        %s216 = ssub.s32 %s11, 1
        %p217 = scmp.lt.s32.totalorder %s20, 1
        %s218 = scalar_select %p217, %s20, 1
        %s219 = smul.addr %s218, 8
        %s220 = smul.addr %s219, 8
        %s221 = scalar_lea.vmem %s0, %s220
        %p222 = pneg %p49
        %p223 = pneg %p46
        %p224 = scmp.lt.s32.totalorder %s20, 1
        %s225 = scalar_select %p224, %s20, 1
        %s226 = smul.addr %s225, 2
        %s227 = smul.addr %s226, 8
        %s228 = scalar_lea.vmem %s1, %s227
        %p229 = pneg %p75
        %p230 = pneg %p72
        %p231 = pneg %p96
        %p232 = pneg %p93
        %p233 = pneg %p117
        %p234 = pneg %p114
        %p235 = pneg %p138
        %p236 = pneg %p135
        %p237 = pneg %p166
        %p238 = pneg %p163
        %s239 = sand.u32 %s153, 1
        %s240 = sand.u32 %s153, 1
        %s241 = smul.addr %s240, 32
        %s242 = scalar_lea.vmem [#allocation4], %s241
        %p243 = scmp.lt.s32.totalorder %s20, 1
        %s244 = scalar_select %p243, %s20, 1
        %s245 = smul.addr %s244, 8
        %s246 = smul.addr %s245, 8
        %s247 = scalar_lea.vmem %s0, %s246
        %p248 = scmp.lt.s32.totalorder %s20, 1
        %s249 = scalar_select %p248, %s20, 1
        %s250 = smul.addr %s249, 2
        %s251 = smul.addr %s250, 8
        %s252 = scalar_lea.vmem %s1, %s251
        %p254 = scmp.eq.s32.totalorder %s21, 0
        // Predicated region
        $region41: #{pcn_forward.1} parent=39 // pred_check
          %p255 = pneg %p254
        $region42: #{pcn_forward.1} parent=39 // pred_check_branch
          %257 = sbr.rel (%p255) target = $region44
        $region43: #{pcn_forward.1} parent=39 // pred_region
          %v258 = vld [vmem:[%s252] sm:$0xff]
          %v259 = vld [vmem:[%s252 + $0x8] sm:$0xff]
          %262 = vrot.lane.b32.xlu0 %v258, 125
          %v263 = vpop.permute.xlu0 %262
          %264 = vrot.lane.b32.xlu0 %v259, 125
          %v265 = vpop.permute.xlu0 %264
          %v268 = vmul.f32 %v258, %v263
          %v269 = vmul.f32 %v259, %v265
          %270 = vrot.lane.b32.xlu0 %v258, 127
          %v271 = vpop.permute.xlu0 %270
          %272 = vrot.lane.b32.xlu0 %v259, 127
          %v273 = vpop.permute.xlu0 %272
          %v276 = vmul.f32 %v258, %v271
          %v277 = vmul.f32 %v259, %v273
          %280 = vrot.lane.b32.xlu0 %v276, 127
          %v281 = vpop.permute.xlu0 %280
          %282 = vrot.lane.b32.xlu0 %v277, 127
          %v283 = vpop.permute.xlu0 %282
          %v286 = vsub.f32 %v268, %v281
          %v287 = vsub.f32 %v269, %v283
          %v288 = vrcp.pop %v286
          %v289 = vmul.f32 %v286, %v288
          %v290 = vsub.f32 1.0, %v289
          %v291 = vmul.f32 %v288, %v290
          %v292 = vadd.f32 %v288, %v291
          %vm293 = vweird.f32 %v286
          %vm294 = vweird.f32 %v288
          %vm295 = vmor %vm293, %vm294
          %v296 = vsel %vm295, %v288, %v292
          %v297 = vand.u32 2147483647, %v286
          %vm298 = vcmp.eq.f32.partialorder %v297, 8.507059e+37
          %v299 = vand.u32 %v286, 2147483648
          %v300 = vor.u32 1.1754944e-38, %v299
          %v301 = vsel %vm298, %v300, %v296
          %v302 = vmul.f32 1.0, %v301
          %v303 = vrcp.pop %v287
          %v304 = vmul.f32 %v287, %v303
          %v305 = vsub.f32 1.0, %v304
          %v306 = vmul.f32 %v303, %v305
          %v307 = vadd.f32 %v303, %v306
          %vm308 = vweird.f32 %v287
          %vm309 = vweird.f32 %v303
          %vm310 = vmor %vm308, %vm309
          %v311 = vsel %vm310, %v303, %v307
          %v312 = vand.u32 2147483647, %v287
          %vm313 = vcmp.eq.f32.partialorder %v312, 8.507059e+37
          %v314 = vand.u32 %v287, 2147483648
          %v315 = vor.u32 1.1754944e-38, %v314
          %v316 = vsel %vm313, %v315, %v311
          %v317 = vmul.f32 1.0, %v316
          %320 = vrot.lane.b32.xlu0 %v302, 3
          %v321 = vpop.permute.xlu0 %320
          %322 = vrot.lane.b32.xlu0 %v317, 3
          %v323 = vpop.permute.xlu0 %322
          %v326 = vmul.f32 %v258, %v321
          %v327 = vmul.f32 %v259, %v323
          %v328 = vsub.f32 0.0, %v258
          %v329 = vsub.f32 0.0, %v259
          %330 = vrot.lane.b32.xlu0 %v302, 1
          %v331 = vpop.permute.xlu0 %330
          %332 = vrot.lane.b32.xlu0 %v317, 1
          %v333 = vpop.permute.xlu0 %332
          %v336 = vmul.f32 %v328, %v331
          %v337 = vmul.f32 %v329, %v333
          %338 = vrot.lane.b32.xlu0 %v302, 2
          %v339 = vpop.permute.xlu0 %338
          %340 = vrot.lane.b32.xlu0 %v317, 2
          %v341 = vpop.permute.xlu0 %340
          %v344 = vmul.f32 %v328, %v339
          %v345 = vmul.f32 %v329, %v341
          %v346 = vmul.f32 %v258, %v302
          %v347 = vmul.f32 %v259, %v317
          %v348 = vld [vmem:[%s247] sm:$0xff]
          %v349 = vld [vmem:[%s247 + $0x8] sm:$0xff]
          %v350 = vld [vmem:[%s247 + $0x10] sm:$0xff]
          %v351 = vld [vmem:[%s247 + $0x18] sm:$0xff]
          %352 = vset.pattern.permute.xlu0 0
          %353 = vperm.xlu0 %352, %v258
          %v354 = vpop.permute.xlu0 %353
          %356 = vset.pattern.permute.xlu0 0
          %357 = vperm.xlu0 %356, %v259
          %v358 = vpop.permute.xlu0 %357
          %v360 = vsub.f32 %v348, %v354
          %v361 = vsub.f32 %v349, %v354
          %v362 = vsub.f32 %v350, %v358
          %v363 = vsub.f32 %v351, %v358
          %s364 = scalar_lea.vmem %s247, 32
          %v365 = vld [vmem:[%s364] sm:$0xff]
          %v366 = vld [vmem:[%s364 + $0x8] sm:$0xff]
          %v367 = vld [vmem:[%s364 + $0x10] sm:$0xff]
          %v368 = vld [vmem:[%s364 + $0x18] sm:$0xff]
          %369 = vset.pattern.permute.xlu0 1
          %370 = vperm.xlu0 %369, %v258
          %v371 = vpop.permute.xlu0 %370
          %373 = vset.pattern.permute.xlu0 1
          %374 = vperm.xlu0 %373, %v259
          %v375 = vpop.permute.xlu0 %374
          %v377 = vsub.f32 %v365, %v371
          %v378 = vsub.f32 %v366, %v371
          %v379 = vsub.f32 %v367, %v375
          %v380 = vsub.f32 %v368, %v375
          %382 = vset.pattern.permute.xlu0 5
          %383 = vperm.xlu0 %382, %v326
          %v384 = vpop.permute.xlu0 %383
          %387 = vset.pattern.permute.xlu0 5
          %388 = vperm.xlu0 %387, %v327
          %v389 = vpop.permute.xlu0 %388
          %v391 = vmul.f32 %v384, %v360
          %v392 = vmul.f32 %v384, %v361
          %v393 = vmul.f32 %v389, %v362
          %v394 = vmul.f32 %v389, %v363
          %396 = vset.pattern.permute.xlu0 3
          %397 = vperm.xlu0 %396, %v336
          %v398 = vpop.permute.xlu0 %397
          %401 = vset.pattern.permute.xlu0 3
          %402 = vperm.xlu0 %401, %v337
          %v403 = vpop.permute.xlu0 %402
          %v405 = vmul.f32 %v398, %v377
          %v406 = vmul.f32 %v398, %v378
          %v407 = vmul.f32 %v403, %v379
          %v408 = vmul.f32 %v403, %v380
          %v409 = vadd.f32 %v391, %v405
          %v410 = vadd.f32 %v392, %v406
          %v411 = vadd.f32 %v393, %v407
          %v412 = vadd.f32 %v394, %v408
          %v413 = vmax.f32 %v409, -6.0
          %v414 = vmax.f32 %v410, -6.0
          %v415 = vmax.f32 %v411, -6.0
          %v416 = vmax.f32 %v412, -6.0
          %v417 = vmin.f32 %v413, 6.0
          %v418 = vmin.f32 %v414, 6.0
          %v419 = vmin.f32 %v415, 6.0
          %v420 = vmin.f32 %v416, 6.0
          %422 = vset.pattern.permute.xlu0 4
          %423 = vperm.xlu0 %422, %v344
          %v424 = vpop.permute.xlu0 %423
          %427 = vset.pattern.permute.xlu0 4
          %428 = vperm.xlu0 %427, %v345
          %v429 = vpop.permute.xlu0 %428
          %v431 = vmul.f32 %v424, %v360
          %v432 = vmul.f32 %v424, %v361
          %v433 = vmul.f32 %v429, %v362
          %v434 = vmul.f32 %v429, %v363
          %436 = vset.pattern.permute.xlu0 2
          %437 = vperm.xlu0 %436, %v346
          %v438 = vpop.permute.xlu0 %437
          %441 = vset.pattern.permute.xlu0 2
          %442 = vperm.xlu0 %441, %v347
          %v443 = vpop.permute.xlu0 %442
          %v445 = vmul.f32 %v438, %v377
          %v446 = vmul.f32 %v438, %v378
          %v447 = vmul.f32 %v443, %v379
          %v448 = vmul.f32 %v443, %v380
          %v449 = vadd.f32 %v431, %v445
          %v450 = vadd.f32 %v432, %v446
          %v451 = vadd.f32 %v433, %v447
          %v452 = vadd.f32 %v434, %v448
          %v453 = vmax.f32 %v449, -6.0
          %v454 = vmax.f32 %v450, -6.0
          %v455 = vmax.f32 %v451, -6.0
          %v456 = vmax.f32 %v452, -6.0
          %v457 = vmin.f32 %v453, 6.0
          %v458 = vmin.f32 %v454, 6.0
          %v459 = vmin.f32 %v455, 6.0
          %v460 = vmin.f32 %v456, 6.0
          %461 = vst [vmem:[#allocation2] sm:$0xff] 0.0
          %462 = vst [vmem:[#allocation2 + $0x18] sm:$0xff] 0.0
          %463 = vst [vmem:[#allocation2 + $0x30] sm:$0xff] 0.0
          %464 = vst [vmem:[#allocation2 + $0x48] sm:$0xff] 0.0
          %465 = vst [vmem:[#allocation2 + $0x8] sm:$0xff] %v417
          %466 = vst [vmem:[#allocation2 + $0x10] sm:$0xff] %v418
          %467 = vst [vmem:[#allocation2 + $0x20] sm:$0xff] %v419
          %468 = vst [vmem:[#allocation2 + $0x28] sm:$0xff] %v420
          %469 = vst [vmem:[#allocation2 + $0x38] sm:$0xff] %v457
          %470 = vst [vmem:[#allocation2 + $0x40] sm:$0xff] %v458
          %471 = vst [vmem:[#allocation2 + $0x50] sm:$0xff] %v459
          %472 = vst [vmem:[#allocation2 + $0x58] sm:$0xff] %v460
          %s473 = scalar_lea.vmem [#allocation2], 96
          %474 = vst [vmem:[%s473 + $0x10] sm:$0xff] 0.0
          %475 = vst [vmem:[%s473 + $0x28] sm:$0xff] 0.0
          %476 = vst [vmem:[%s473 + $0x40] sm:$0xff] 0.0
          %477 = vst [vmem:[%s473 + $0x58] sm:$0xff] 0.0
          %478 = vst [vmem:[%s473] sm:$0xff] %v417
          %479 = vst [vmem:[%s473 + $0x8] sm:$0xff] %v418
          %480 = vst [vmem:[%s473 + $0x18] sm:$0xff] %v419
          %481 = vst [vmem:[%s473 + $0x20] sm:$0xff] %v420
          %482 = vst [vmem:[%s473 + $0x30] sm:$0xff] %v457
          %483 = vst [vmem:[%s473 + $0x38] sm:$0xff] %v458
          %484 = vst [vmem:[%s473 + $0x48] sm:$0xff] %v459
          %485 = vst [vmem:[%s473 + $0x50] sm:$0xff] %v460
        $region44: #{pcn_forward.1} parent=39 // pred_fallthru
          _
        %s486 = smul.u32 %s21, 12
        %s487 = smul.addr %s486, 8
        %s488 = scalar_lea.vmem [#allocation2], %s487
        %v489 = vld [vmem:[%s488] sm:$0xff]
        %v490 = vld [vmem:[%s488 + $0x8] sm:$0xff]
        %v491 = vld [vmem:[%s488 + $0x10] sm:$0xff]
        %v492 = vld [vmem:[%s488 + $0x18] sm:$0xff]
        %v493 = vld [vmem:[%s488 + $0x20] sm:$0xff]
        %v494 = vld [vmem:[%s488 + $0x28] sm:$0xff]
        %v495 = vld [vmem:[%s488 + $0x30] sm:$0xff]
        %v496 = vld [vmem:[%s488 + $0x38] sm:$0xff]
        %v497 = vld [vmem:[%s488 + $0x40] sm:$0xff]
        %v498 = vld [vmem:[%s488 + $0x48] sm:$0xff]
        %v499 = vld [vmem:[%s488 + $0x50] sm:$0xff]
        %v500 = vld [vmem:[%s488 + $0x58] sm:$0xff]
        %v501 = vld [vmem:[%s4] sm:$0xff]
        %v502 = vld [vmem:[%s4 + $0x8] sm:$0xff]
        %503 = vrot.lane.b32.xlu0 %v489, 17
        %v504 = vpop.permute.xlu0 %503
        %505 = vrot.lane.b32.xlu0 %v492, 17
        %v506 = vpop.permute.xlu0 %505
        %507 = vrot.lane.b32.xlu0 %v495, 17
        %v508 = vpop.permute.xlu0 %507
        %509 = vrot.lane.b32.xlu0 %v498, 17
        %v510 = vpop.permute.xlu0 %509
        %511 = vrot.lane.b32.xlu0 %v490, 17
        %v512 = vpop.permute.xlu0 %511
        %513 = vrot.lane.b32.xlu0 %v493, 17
        %v514 = vpop.permute.xlu0 %513
        %515 = vrot.lane.b32.xlu0 %v496, 17
        %v516 = vpop.permute.xlu0 %515
        %517 = vrot.lane.b32.xlu0 %v499, 17
        %v518 = vpop.permute.xlu0 %517
        %v519 = vlaneseq
        %v520 = vand.u32 %v519, 127
        %vm521 = vcmp.lt.s32.totalorder %v520, 17
        %v522 = vsel %vm521, %v504, %v512
        %v523 = vsel %vm521, %v506, %v514
        %v524 = vsel %vm521, %v508, %v516
        %v525 = vsel %vm521, %v510, %v518
        %v526 = vperm.slane %v501, 0
        %v527 = vmul.f32 %v522, %v526
        %v528 = vmul.f32 %v523, %v526
        %v529 = vmul.f32 %v524, %v526
        %v530 = vmul.f32 %v525, %v526
        %v531 = vpack.c.bf16 %v527, %v527
        %v532 = vpack.c.bf16 %v528, %v528
        %v533 = vpack.c.bf16 %v529, %v529
        %v534 = vpack.c.bf16 %v530, %v530
        %535 = vst [vmem:[#allocation3] sm:$0xf] %v531
        %536 = vst [vmem:[#allocation3 + $0x4] sm:$0xf] %v532
        %537 = vst [vmem:[#allocation3 + $0x8] sm:$0xf] %v533
        %538 = vst [vmem:[#allocation3 + $0xc] sm:$0xf] %v534
        %539 = vrot.lane.b32.xlu0 %v489, 16
        %v540 = vpop.permute.xlu0 %539
        %541 = vrot.lane.b32.xlu0 %v492, 16
        %v542 = vpop.permute.xlu0 %541
        %543 = vrot.lane.b32.xlu0 %v495, 16
        %v544 = vpop.permute.xlu0 %543
        %545 = vrot.lane.b32.xlu0 %v498, 16
        %v546 = vpop.permute.xlu0 %545
        %547 = vrot.lane.b32.xlu0 %v490, 16
        %v548 = vpop.permute.xlu0 %547
        %549 = vrot.lane.b32.xlu0 %v493, 16
        %v550 = vpop.permute.xlu0 %549
        %551 = vrot.lane.b32.xlu0 %v496, 16
        %v552 = vpop.permute.xlu0 %551
        %553 = vrot.lane.b32.xlu0 %v499, 16
        %v554 = vpop.permute.xlu0 %553
        %vm555 = vcmp.lt.s32.totalorder %v520, 16
        %v556 = vsel %vm555, %v540, %v548
        %v557 = vsel %vm555, %v542, %v550
        %v558 = vsel %vm555, %v544, %v552
        %v559 = vsel %vm555, %v546, %v554
        %v560 = vpack.c.bf16 %v556, %v556
        %v561 = vpack.c.bf16 %v557, %v557
        %v562 = vpack.c.bf16 %v558, %v558
        %v563 = vpack.c.bf16 %v559, %v559
        %564 = vst [vmem:[#allocation3 + $0x10] sm:$0xf] %v560
        %565 = vst [vmem:[#allocation3 + $0x14] sm:$0xf] %v561
        %566 = vst [vmem:[#allocation3 + $0x18] sm:$0xf] %v562
        %567 = vst [vmem:[#allocation3 + $0x1c] sm:$0xf] %v563
        %568 = vrot.lane.b32.xlu0 %v489, 15
        %v569 = vpop.permute.xlu0 %568
        %570 = vrot.lane.b32.xlu0 %v492, 15
        %v571 = vpop.permute.xlu0 %570
        %572 = vrot.lane.b32.xlu0 %v495, 15
        %v573 = vpop.permute.xlu0 %572
        %574 = vrot.lane.b32.xlu0 %v498, 15
        %v575 = vpop.permute.xlu0 %574
        %576 = vrot.lane.b32.xlu0 %v490, 15
        %v577 = vpop.permute.xlu0 %576
        %578 = vrot.lane.b32.xlu0 %v493, 15
        %v579 = vpop.permute.xlu0 %578
        %580 = vrot.lane.b32.xlu0 %v496, 15
        %v581 = vpop.permute.xlu0 %580
        %582 = vrot.lane.b32.xlu0 %v499, 15
        %v583 = vpop.permute.xlu0 %582
        %vm584 = vcmp.lt.s32.totalorder %v520, 15
        %v585 = vsel %vm584, %v569, %v577
        %v586 = vsel %vm584, %v571, %v579
        %v587 = vsel %vm584, %v573, %v581
        %v588 = vsel %vm584, %v575, %v583
        %v589 = vperm.slane %v501, 2
        %v590 = vmul.f32 %v585, %v589
        %v591 = vmul.f32 %v586, %v589
        %v592 = vmul.f32 %v587, %v589
        %v593 = vmul.f32 %v588, %v589
        %v594 = vpack.c.bf16 %v590, %v590
        %v595 = vpack.c.bf16 %v591, %v591
        %v596 = vpack.c.bf16 %v592, %v592
        %v597 = vpack.c.bf16 %v593, %v593
        %598 = vst [vmem:[#allocation3 + $0x20] sm:$0xf] %v594
        %599 = vst [vmem:[#allocation3 + $0x24] sm:$0xf] %v595
        %600 = vst [vmem:[#allocation3 + $0x28] sm:$0xf] %v596
        %601 = vst [vmem:[#allocation3 + $0x2c] sm:$0xf] %v597
        %602 = vrot.lane.b32.xlu0 %v489, 1
        %v603 = vpop.permute.xlu0 %602
        %604 = vrot.lane.b32.xlu0 %v492, 1
        %v605 = vpop.permute.xlu0 %604
        %606 = vrot.lane.b32.xlu0 %v495, 1
        %v607 = vpop.permute.xlu0 %606
        %608 = vrot.lane.b32.xlu0 %v498, 1
        %v609 = vpop.permute.xlu0 %608
        %610 = vrot.lane.b32.xlu0 %v490, 1
        %v611 = vpop.permute.xlu0 %610
        %612 = vrot.lane.b32.xlu0 %v493, 1
        %v613 = vpop.permute.xlu0 %612
        %614 = vrot.lane.b32.xlu0 %v496, 1
        %v615 = vpop.permute.xlu0 %614
        %616 = vrot.lane.b32.xlu0 %v499, 1
        %v617 = vpop.permute.xlu0 %616
        %vm618 = vcmp.lt.s32.totalorder %v520, 1
        %v619 = vsel %vm618, %v603, %v611
        %v620 = vsel %vm618, %v605, %v613
        %v621 = vsel %vm618, %v607, %v615
        %v622 = vsel %vm618, %v609, %v617
        %v623 = vperm.slane %v501, 3
        %v624 = vmul.f32 %v619, %v623
        %v625 = vmul.f32 %v620, %v623
        %v626 = vmul.f32 %v621, %v623
        %v627 = vmul.f32 %v622, %v623
        %v628 = vpack.c.bf16 %v624, %v624
        %v629 = vpack.c.bf16 %v625, %v625
        %v630 = vpack.c.bf16 %v626, %v626
        %v631 = vpack.c.bf16 %v627, %v627
        %632 = vst [vmem:[#allocation3 + $0x30] sm:$0xf] %v628
        %633 = vst [vmem:[#allocation3 + $0x34] sm:$0xf] %v629
        %634 = vst [vmem:[#allocation3 + $0x38] sm:$0xf] %v630
        %635 = vst [vmem:[#allocation3 + $0x3c] sm:$0xf] %v631
        %v636 = vpack.c.bf16 %v490, %v490
        %v637 = vpack.c.bf16 %v493, %v493
        %v638 = vpack.c.bf16 %v496, %v496
        %v639 = vpack.c.bf16 %v499, %v499
        %640 = vst [vmem:[#allocation3 + $0x40] sm:$0xf] %v636
        %641 = vst [vmem:[#allocation3 + $0x44] sm:$0xf] %v637
        %642 = vst [vmem:[#allocation3 + $0x48] sm:$0xf] %v638
        %643 = vst [vmem:[#allocation3 + $0x4c] sm:$0xf] %v639
        %644 = vrot.lane.b32.xlu0 %v490, 127
        %v645 = vpop.permute.xlu0 %644
        %646 = vrot.lane.b32.xlu0 %v493, 127
        %v647 = vpop.permute.xlu0 %646
        %648 = vrot.lane.b32.xlu0 %v496, 127
        %v649 = vpop.permute.xlu0 %648
        %650 = vrot.lane.b32.xlu0 %v499, 127
        %v651 = vpop.permute.xlu0 %650
        %652 = vrot.lane.b32.xlu0 %v491, 127
        %v653 = vpop.permute.xlu0 %652
        %654 = vrot.lane.b32.xlu0 %v494, 127
        %v655 = vpop.permute.xlu0 %654
        %656 = vrot.lane.b32.xlu0 %v497, 127
        %v657 = vpop.permute.xlu0 %656
        %658 = vrot.lane.b32.xlu0 %v500, 127
        %v659 = vpop.permute.xlu0 %658
        %vm660 = vcmp.lt.s32.totalorder %v520, 127
        %v661 = vsel %vm660, %v645, %v653
        %v662 = vsel %vm660, %v647, %v655
        %v663 = vsel %vm660, %v649, %v657
        %v664 = vsel %vm660, %v651, %v659
        %v665 = vperm.slane %v501, 5
        %v666 = vmul.f32 %v661, %v665
        %v667 = vmul.f32 %v662, %v665
        %v668 = vmul.f32 %v663, %v665
        %v669 = vmul.f32 %v664, %v665
        %v670 = vpack.c.bf16 %v666, %v666
        %v671 = vpack.c.bf16 %v667, %v667
        %v672 = vpack.c.bf16 %v668, %v668
        %v673 = vpack.c.bf16 %v669, %v669
        %674 = vst [vmem:[#allocation3 + $0x50] sm:$0xf] %v670
        %675 = vst [vmem:[#allocation3 + $0x54] sm:$0xf] %v671
        %676 = vst [vmem:[#allocation3 + $0x58] sm:$0xf] %v672
        %677 = vst [vmem:[#allocation3 + $0x5c] sm:$0xf] %v673
        %678 = vrot.lane.b32.xlu0 %v490, 113
        %v679 = vpop.permute.xlu0 %678
        %680 = vrot.lane.b32.xlu0 %v493, 113
        %v681 = vpop.permute.xlu0 %680
        %682 = vrot.lane.b32.xlu0 %v496, 113
        %v683 = vpop.permute.xlu0 %682
        %684 = vrot.lane.b32.xlu0 %v499, 113
        %v685 = vpop.permute.xlu0 %684
        %686 = vrot.lane.b32.xlu0 %v491, 113
        %v687 = vpop.permute.xlu0 %686
        %688 = vrot.lane.b32.xlu0 %v494, 113
        %v689 = vpop.permute.xlu0 %688
        %690 = vrot.lane.b32.xlu0 %v497, 113
        %v691 = vpop.permute.xlu0 %690
        %692 = vrot.lane.b32.xlu0 %v500, 113
        %v693 = vpop.permute.xlu0 %692
        %vm694 = vcmp.lt.s32.totalorder %v520, 113
        %v695 = vsel %vm694, %v679, %v687
        %v696 = vsel %vm694, %v681, %v689
        %v697 = vsel %vm694, %v683, %v691
        %v698 = vsel %vm694, %v685, %v693
        %v699 = vperm.slane %v501, 6
        %v700 = vmul.f32 %v695, %v699
        %v701 = vmul.f32 %v696, %v699
        %v702 = vmul.f32 %v697, %v699
        %v703 = vmul.f32 %v698, %v699
        %v704 = vpack.c.bf16 %v700, %v700
        %v705 = vpack.c.bf16 %v701, %v701
        %v706 = vpack.c.bf16 %v702, %v702
        %v707 = vpack.c.bf16 %v703, %v703
        %708 = vst [vmem:[#allocation3 + $0x60] sm:$0xf] %v704
        %709 = vst [vmem:[#allocation3 + $0x64] sm:$0xf] %v705
        %710 = vst [vmem:[#allocation3 + $0x68] sm:$0xf] %v706
        %711 = vst [vmem:[#allocation3 + $0x6c] sm:$0xf] %v707
        %712 = vrot.lane.b32.xlu0 %v490, 112
        %v713 = vpop.permute.xlu0 %712
        %714 = vrot.lane.b32.xlu0 %v493, 112
        %v715 = vpop.permute.xlu0 %714
        %716 = vrot.lane.b32.xlu0 %v496, 112
        %v717 = vpop.permute.xlu0 %716
        %718 = vrot.lane.b32.xlu0 %v499, 112
        %v719 = vpop.permute.xlu0 %718
        %720 = vrot.lane.b32.xlu0 %v491, 112
        %v721 = vpop.permute.xlu0 %720
        %722 = vrot.lane.b32.xlu0 %v494, 112
        %v723 = vpop.permute.xlu0 %722
        %724 = vrot.lane.b32.xlu0 %v497, 112
        %v725 = vpop.permute.xlu0 %724
        %726 = vrot.lane.b32.xlu0 %v500, 112
        %v727 = vpop.permute.xlu0 %726
        %vm728 = vcmp.lt.s32.totalorder %v520, 112
        %v729 = vsel %vm728, %v713, %v721
        %v730 = vsel %vm728, %v715, %v723
        %v731 = vsel %vm728, %v717, %v725
        %v732 = vsel %vm728, %v719, %v727
        %v733 = vpack.c.bf16 %v729, %v729
        %v734 = vpack.c.bf16 %v730, %v730
        %v735 = vpack.c.bf16 %v731, %v731
        %v736 = vpack.c.bf16 %v732, %v732
        %737 = vst [vmem:[#allocation3 + $0x70] sm:$0xf] %v733
        %738 = vst [vmem:[#allocation3 + $0x74] sm:$0xf] %v734
        %739 = vst [vmem:[#allocation3 + $0x78] sm:$0xf] %v735
        %740 = vst [vmem:[#allocation3 + $0x7c] sm:$0xf] %v736
        %741 = vrot.lane.b32.xlu0 %v490, 111
        %v742 = vpop.permute.xlu0 %741
        %743 = vrot.lane.b32.xlu0 %v493, 111
        %v744 = vpop.permute.xlu0 %743
        %745 = vrot.lane.b32.xlu0 %v496, 111
        %v746 = vpop.permute.xlu0 %745
        %747 = vrot.lane.b32.xlu0 %v499, 111
        %v748 = vpop.permute.xlu0 %747
        %749 = vrot.lane.b32.xlu0 %v491, 111
        %v750 = vpop.permute.xlu0 %749
        %751 = vrot.lane.b32.xlu0 %v494, 111
        %v752 = vpop.permute.xlu0 %751
        %753 = vrot.lane.b32.xlu0 %v497, 111
        %v754 = vpop.permute.xlu0 %753
        %755 = vrot.lane.b32.xlu0 %v500, 111
        %v756 = vpop.permute.xlu0 %755
        %vm757 = vcmp.lt.s32.totalorder %v520, 111
        %v758 = vsel %vm757, %v742, %v750
        %v759 = vsel %vm757, %v744, %v752
        %v760 = vsel %vm757, %v746, %v754
        %v761 = vsel %vm757, %v748, %v756
        %v762 = vperm.slane %v502, 0
        %v763 = vmul.f32 %v758, %v762
        %v764 = vmul.f32 %v759, %v762
        %v765 = vmul.f32 %v760, %v762
        %v766 = vmul.f32 %v761, %v762
        %v767 = vpack.c.bf16 %v763, %v763
        %v768 = vpack.c.bf16 %v764, %v764
        %v769 = vpack.c.bf16 %v765, %v765
        %v770 = vpack.c.bf16 %v766, %v766
        %771 = vst [vmem:[#allocation3 + $0x80] sm:$0xf] %v767
        %772 = vst [vmem:[#allocation3 + $0x84] sm:$0xf] %v768
        %773 = vst [vmem:[#allocation3 + $0x88] sm:$0xf] %v769
        %774 = vst [vmem:[#allocation3 + $0x8c] sm:$0xf] %v770
        %v775 = vld [vmem:[%s2] sm:$0xff]
        %v776 = vld [vmem:[%s2 + $0x8] sm:$0xf]
        %v777 = vld [vmem:[%s2 + $0xc] sm:$0xff]
        %v778 = vld [vmem:[%s2 + $0x14] sm:$0xf]
        %v779 = vld [vmem:[%s2 + $0x18] sm:$0xff]
        %v780 = vld [vmem:[%s2 + $0x20] sm:$0xf]
        %v781 = vld [vmem:[%s2 + $0x24] sm:$0xff]
        %v782 = vld [vmem:[%s2 + $0x2c] sm:$0xf]
        %v783 = vld [vmem:[#allocation3] sm:$0xf]
        %v784 = vld [vmem:[#allocation3 + $0x4] sm:$0xf]
        %v785 = vld [vmem:[#allocation3 + $0x8] sm:$0xf]
        %v786 = vld [vmem:[#allocation3 + $0xc] sm:$0xf]
        %v787 = vld [vmem:[#allocation3 + $0x10] sm:$0xf]
        %v788 = vld [vmem:[#allocation3 + $0x14] sm:$0xf]
        %v789 = vld [vmem:[#allocation3 + $0x18] sm:$0xf]
        %v790 = vld [vmem:[#allocation3 + $0x1c] sm:$0xf]
        %v791 = vld [vmem:[#allocation3 + $0x20] sm:$0xf]
        %v792 = vld [vmem:[#allocation3 + $0x24] sm:$0xf]
        %v793 = vld [vmem:[#allocation3 + $0x28] sm:$0xf]
        %v794 = vld [vmem:[#allocation3 + $0x2c] sm:$0xf]
        %v795 = vld [vmem:[#allocation3 + $0x30] sm:$0xf]
        %v796 = vld [vmem:[#allocation3 + $0x34] sm:$0xf]
        %v797 = vld [vmem:[#allocation3 + $0x38] sm:$0xf]
        %v798 = vld [vmem:[#allocation3 + $0x3c] sm:$0xf]
        %v799 = vld [vmem:[#allocation3 + $0x40] sm:$0xf]
        %v800 = vld [vmem:[#allocation3 + $0x44] sm:$0xf]
        %v801 = vld [vmem:[#allocation3 + $0x48] sm:$0xf]
        %v802 = vld [vmem:[#allocation3 + $0x4c] sm:$0xf]
        %v803 = vld [vmem:[#allocation3 + $0x50] sm:$0xf]
        %v804 = vld [vmem:[#allocation3 + $0x54] sm:$0xf]
        %v805 = vld [vmem:[#allocation3 + $0x58] sm:$0xf]
        %v806 = vld [vmem:[#allocation3 + $0x5c] sm:$0xf]
        %v807 = vld [vmem:[#allocation3 + $0x60] sm:$0xf]
        %v808 = vld [vmem:[#allocation3 + $0x64] sm:$0xf]
        %v809 = vld [vmem:[#allocation3 + $0x68] sm:$0xf]
        %v810 = vld [vmem:[#allocation3 + $0x6c] sm:$0xf]
        %v811 = vld [vmem:[#allocation3 + $0x70] sm:$0xf]
        %v812 = vld [vmem:[#allocation3 + $0x74] sm:$0xf]
        %v813 = vld [vmem:[#allocation3 + $0x78] sm:$0xf]
        %v814 = vld [vmem:[#allocation3 + $0x7c] sm:$0xf]
        %v815 = vld [vmem:[#allocation3 + $0x80] sm:$0xf]
        %v816 = vld [vmem:[#allocation3 + $0x84] sm:$0xf]
        %v817 = vld [vmem:[#allocation3 + $0x88] sm:$0xf]
        %v818 = vld [vmem:[#allocation3 + $0x8c] sm:$0xf]
        %v819 = vld [vmem:[%s3] sm:$0xff]
        %v820 = vld [vmem:[%s3 + $0x8] sm:$0xff]
        %v821 = vld [vmem:[%s3 + $0x10] sm:$0xff]
        %v822 = vld [vmem:[%s3 + $0x18] sm:$0xff]
        %824 = vset.pattern.permute.xlu0 0
        %825 = vperm.xlu0 %824, %v819
        %v826 = vpop.permute.xlu0 %825
        %829 = vset.pattern.permute.xlu0 0
        %830 = vperm.xlu0 %829, %v820
        %v831 = vpop.permute.xlu0 %830
        %834 = vset.pattern.permute.xlu0 0
        %835 = vperm.xlu0 %834, %v821
        %v836 = vpop.permute.xlu0 %835
        %839 = vset.pattern.permute.xlu0 0
        %840 = vperm.xlu0 %839, %v822
        %v841 = vpop.permute.xlu0 %840
        %v851 = vunpack.c.l.b16 %v775
        %v852 = vunpack.c.h.b16 %v775
        %v853 = vunpack.c.l.b16 %v776
        %v854 = vunpack.c.l.b16 %v777
        %v855 = vunpack.c.h.b16 %v777
        %v856 = vunpack.c.l.b16 %v778
        %v857 = vunpack.c.l.b16 %v779
        %v858 = vunpack.c.h.b16 %v779
        %v859 = vunpack.c.l.b16 %v780
        %v860 = vunpack.c.l.b16 %v781
        %v861 = vunpack.c.h.b16 %v781
        %v862 = vunpack.c.l.b16 %v782
        %v863 = vpack.c.b16 %v854, %v851
        %v864 = vpack.c.b16 %v855, %v852
        %v865 = vpack.c.b16 %v856, %v853
        %v866 = vpack.c.b16 %v860, %v857
        %v867 = vpack.c.b16 %v861, %v858
        %v868 = vpack.c.b16 %v862, %v859
        %v909 = vunpack.c.l.b16 %v783
        %v910 = vunpack.c.l.b16 %v784
        %v911 = vunpack.c.l.b16 %v785
        %v912 = vunpack.c.l.b16 %v786
        %v913 = vunpack.c.l.b16 %v787
        %v914 = vunpack.c.l.b16 %v788
        %v915 = vunpack.c.l.b16 %v789
        %v916 = vunpack.c.l.b16 %v790
        %v917 = vunpack.c.l.b16 %v791
        %v918 = vunpack.c.l.b16 %v792
        %v919 = vunpack.c.l.b16 %v793
        %v920 = vunpack.c.l.b16 %v794
        %v921 = vunpack.c.l.b16 %v795
        %v922 = vunpack.c.l.b16 %v796
        %v923 = vunpack.c.l.b16 %v797
        %v924 = vunpack.c.l.b16 %v798
        %v925 = vunpack.c.l.b16 %v799
        %v926 = vunpack.c.l.b16 %v800
        %v927 = vunpack.c.l.b16 %v801
        %v928 = vunpack.c.l.b16 %v802
        %v929 = vunpack.c.l.b16 %v803
        %v930 = vunpack.c.l.b16 %v804
        %v931 = vunpack.c.l.b16 %v805
        %v932 = vunpack.c.l.b16 %v806
        %v933 = vunpack.c.l.b16 %v807
        %v934 = vunpack.c.l.b16 %v808
        %v935 = vunpack.c.l.b16 %v809
        %v936 = vunpack.c.l.b16 %v810
        %v937 = vunpack.c.l.b16 %v811
        %v938 = vunpack.c.l.b16 %v812
        %v939 = vunpack.c.l.b16 %v813
        %v940 = vunpack.c.l.b16 %v814
        %v941 = vunpack.c.l.b16 %v815
        %v942 = vunpack.c.l.b16 %v816
        %v943 = vunpack.c.l.b16 %v817
        %v944 = vunpack.c.l.b16 %v818
        %v945 = vpack.c.b16 %v910, %v909
        %v946 = vpack.c.b16 %v912, %v911
        %v947 = vpack.c.b16 %v914, %v913
        %v948 = vpack.c.b16 %v916, %v915
        %v949 = vpack.c.b16 %v918, %v917
        %v950 = vpack.c.b16 %v920, %v919
        %v951 = vpack.c.b16 %v922, %v921
        %v952 = vpack.c.b16 %v924, %v923
        %v953 = vpack.c.b16 %v926, %v925
        %v954 = vpack.c.b16 %v928, %v927
        %v955 = vpack.c.b16 %v930, %v929
        %v956 = vpack.c.b16 %v932, %v931
        %v957 = vpack.c.b16 %v934, %v933
        %v958 = vpack.c.b16 %v936, %v935
        %v959 = vpack.c.b16 %v938, %v937
        %v960 = vpack.c.b16 %v940, %v939
        %v961 = vpack.c.b16 %v942, %v941
        %v962 = vpack.c.b16 %v944, %v943
        %vm981 = vcmask 261120
        %v983 = vsel %vm981, %v865, 0
        %v986 = vsel %vm981, %v868, 0
        %988 = vmatpush.bf16.msra.mxu0 %v952
        %989 = vmatpush.bf16.msra.mxu0 %v951
        %990 = vmatpush.bf16.msra.mxu0 %v950
        %991 = vmatpush.bf16.msra.mxu0 %v949
        %992 = vmatpush.bf16.msra.mxu0 %v948
        %993 = vmatpush.bf16.msra.mxu0 %v947
        %994 = vmatpush.bf16.msra.mxu0 %v946
        %995 = vmatpush.bf16.msra.mxu0 %v945
        %996 = vmatmul.bf16.gmra.mxu0 %v863
        %v997 = vpop.f32.mrf.mxu0
        %v998 = vadd.f32 %v826, %v997
        %v999 = vpop.f32.mrf.mxu0
        %v1000 = vadd.f32 %v831, %v999
        %1001 = vmatmul.bf16.gmra.mxu0 %v866
        %v1002 = vpop.f32.mrf.mxu0
        %v1003 = vadd.f32 %v836, %v1002
        %v1004 = vpop.f32.mrf.mxu0
        %v1005 = vadd.f32 %v841, %v1004
        %1006 = vdwg.mxu0
        %1007 = vmatpush.bf16.msra.mxu0 %v960
        %1008 = vmatpush.bf16.msra.mxu0 %v959
        %1009 = vmatpush.bf16.msra.mxu0 %v958
        %1010 = vmatpush.bf16.msra.mxu0 %v957
        %1011 = vmatpush.bf16.msra.mxu0 %v956
        %1012 = vmatpush.bf16.msra.mxu0 %v955
        %1013 = vmatpush.bf16.msra.mxu0 %v954
        %1014 = vmatpush.bf16.msra.mxu0 %v953
        %1015 = vmatmul.bf16.gmra.mxu0 %v864
        %v1016 = vpop.f32.mrf.mxu0
        %v1017 = vadd.f32 %v998, %v1016
        %v1018 = vpop.f32.mrf.mxu0
        %v1019 = vadd.f32 %v1000, %v1018
        %1020 = vmatmul.bf16.gmra.mxu0 %v867
        %v1021 = vpop.f32.mrf.mxu0
        %v1022 = vadd.f32 %v1003, %v1021
        %v1023 = vpop.f32.mrf.mxu0
        %v1024 = vadd.f32 %v1005, %v1023
        %1025 = vdwg.mxu0
        %1026 = vmatpush.bf16.msra.mxu0 0
        %1027 = vmatpush.bf16.msra.mxu0 0
        %1028 = vmatpush.bf16.msra.mxu0 0
        %1029 = vmatpush.bf16.msra.mxu0 0
        %1030 = vmatpush.bf16.msra.mxu0 0
        %1031 = vmatpush.bf16.msra.mxu0 0
        %1032 = vmatpush.bf16.msra.mxu0 %v962
        %1033 = vmatpush.bf16.msra.mxu0 %v961
        %1034 = vmatmul.bf16.gmra.mxu0 %v983
        %v1035 = vpop.f32.mrf.mxu0
        %v1036 = vadd.f32 %v1017, %v1035
        %v1037 = vpop.f32.mrf.mxu0
        %v1038 = vadd.f32 %v1019, %v1037
        %1039 = vmatmul.bf16.gmra.mxu0 %v986
        %v1040 = vpop.f32.mrf.mxu0
        %v1041 = vadd.f32 %v1022, %v1040
        %v1042 = vpop.f32.mrf.mxu0
        %v1043 = vadd.f32 %v1024, %v1042
        %1044 = vdwg.mxu0
        %v1045 = vld [vmem:[%s252] sm:$0xff]
        %v1046 = vld [vmem:[%s252 + $0x8] sm:$0xff]
        %1048 = vset.pattern.permute.xlu0 2
        %1049 = vperm.xlu0 %1048, %v1045
        %v1050 = vpop.permute.xlu0 %1049
        %1053 = vset.pattern.permute.xlu0 2
        %1054 = vperm.xlu0 %1053, %v1046
        %v1055 = vpop.permute.xlu0 %1054
        %v1057 = vmul.f32 %v1050, %v1036
        %v1058 = vmul.f32 %v1055, %v1038
        %1059 = vset.pattern.permute.xlu0 3
        %1060 = vperm.xlu0 %1059, %v1045
        %v1061 = vpop.permute.xlu0 %1060
        %1063 = vset.pattern.permute.xlu0 3
        %1064 = vperm.xlu0 %1063, %v1046
        %v1065 = vpop.permute.xlu0 %1064
        %v1067 = vmul.f32 %v1061, %v1041
        %v1068 = vmul.f32 %v1065, %v1043
        %v1069 = vadd.f32 %v1057, %v1067
        %v1070 = vadd.f32 %v1058, %v1068
        %1071 = vset.pattern.permute.xlu0 0
        %1072 = vperm.xlu0 %1071, %v1045
        %v1073 = vpop.permute.xlu0 %1072
        %1075 = vset.pattern.permute.xlu0 0
        %1076 = vperm.xlu0 %1075, %v1046
        %v1077 = vpop.permute.xlu0 %1076
        %v1079 = vadd.f32 %v1069, %v1073
        %v1080 = vadd.f32 %v1070, %v1077
        %1081 = vst [vmem:[%s242] sm:$0xff] %v1079
        %1082 = vst [vmem:[%s242 + $0x8] sm:$0xff] %v1080
        %1083 = vset.pattern.permute.xlu0 4
        %1084 = vperm.xlu0 %1083, %v1045
        %v1085 = vpop.permute.xlu0 %1084
        %1087 = vset.pattern.permute.xlu0 4
        %1088 = vperm.xlu0 %1087, %v1046
        %v1089 = vpop.permute.xlu0 %1088
        %v1091 = vmul.f32 %v1085, %v1036
        %v1092 = vmul.f32 %v1089, %v1038
        %1093 = vset.pattern.permute.xlu0 5
        %1094 = vperm.xlu0 %1093, %v1045
        %v1095 = vpop.permute.xlu0 %1094
        %1097 = vset.pattern.permute.xlu0 5
        %1098 = vperm.xlu0 %1097, %v1046
        %v1099 = vpop.permute.xlu0 %1098
        %v1101 = vmul.f32 %v1095, %v1041
        %v1102 = vmul.f32 %v1099, %v1043
        %v1103 = vadd.f32 %v1091, %v1101
        %v1104 = vadd.f32 %v1092, %v1102
        %1105 = vset.pattern.permute.xlu0 1
        %1106 = vperm.xlu0 %1105, %v1045
        %v1107 = vpop.permute.xlu0 %1106
        %1109 = vset.pattern.permute.xlu0 1
        %1110 = vperm.xlu0 %1109, %v1046
        %v1111 = vpop.permute.xlu0 %1110
        %v1113 = vadd.f32 %v1103, %v1107
        %v1114 = vadd.f32 %v1104, %v1111
        %s1115 = scalar_lea.vmem %s242, 16 [#allocation4]
        %1116 = vst [vmem:[%s1115] sm:$0xff] %v1113
        %1117 = vst [vmem:[%s1115 + $0x8] sm:$0xff] %v1114
        %s1118 = sand.u32 %s153, 1
        %s1119 = sand.u32 %s153, 1
        %s1120 = smul.addr %s1119, 32
        %s1121 = scalar_lea.vmem [#allocation4], %s1120
        // Predicated region
        $region45: #{pcn_forward.1} parent=39 // pred_check
          %p1122 = pneg %p163
        $region46: #{pcn_forward.1} parent=39 // pred_check_branch
          %1124 = sbr.rel (%p1122) target = $region48
        $region47: #{pcn_forward.1} parent=39 // pred_region
          %s1125 = smul.addr %s20, 8
          %s1126 = sadd.s32 %s21, %s1125
          %s1127 = smul.addr %s1126, 8
          %s1128 = scalar_lea.vmem %s5, %s1127
          // Predicated region
          $region49: #{pcn_forward.1} parent=47 // pred_check
            _
          $region50: #{pcn_forward.1} parent=47 // pred_check_branch
            %1130 = sbr.rel (0) target = $region52
          $region51: #{pcn_forward.1} parent=47 // pred_region
            // Predicated region
            $region53: #{pcn_forward.1} parent=51 // pred_check
              _
            $region54: #{pcn_forward.1} parent=51 // pred_check_branch
              %1132 = sbr.rel (0) target = $region56
            $region55: #{pcn_forward.1} parent=51 // pred_region
              // Predicated region
              $region68: #{pcn_forward.1} parent=55 // pred_check
                _
              $region69: #{pcn_forward.1} parent=55 // pred_check_branch
                %1154 = sbr.rel (0) target = $region71
              $region70: #{pcn_forward.1} parent=55 // pred_region
                loop: start=0, step=1, limit=1
                $region72: #{pcn_forward.1} parent=70 // loop_pre_header
                  _
                $region73: #{pcn_forward.1} parent=70 // loop_header
                  %s1156 = sphi 0, %s1160
                  %p1157 = scmp.ge.s32.totalorder %s1156, 1
                  %s1161 = sphi %s1121, %s1121
                  %s1162 = sphi %s1128, %s1128
                $region74: #{pcn_forward.1} parent=70 // loop_header_branch
                  %1159 = sbr.rel (%p1157) target = $region78
                $region75: #{pcn_forward.1} parent=70 // loop_body
                  %v1163 = vld [vmem:[%s1161] sm:$0xff]
                  %1164 = vst [vmem:[%s1162] sm:$0xff] %v1163
                  %v1165 = vld [vmem:[%s1161 + $0x8] sm:$0xff]
                  %1166 = vst [vmem:[%s1162 + $0x10] sm:$0xff] %v1165
                  %v1167 = vld [vmem:[%s1161 + $0x10] sm:$0xff]
                  %1168 = vst [vmem:[%s1162 + $0x20] sm:$0xff] %v1167
                  %v1169 = vld [vmem:[%s1161 + $0x18] sm:$0xff]
                  %1170 = vst [vmem:[%s1162 + $0x30] sm:$0xff] %v1169
                $region76: #{pcn_forward.1} parent=70 // loop_footer
                  %s1160 = sadd.s32 1, %s1156
                $region77: #{pcn_forward.1} parent=70 // loop_footer_branch
                  %1155 = sbr.rel target = $region73
                $region78: #{pcn_forward.1} parent=70 // loop_exit
                  _
              $region71: #{pcn_forward.1} parent=55 // pred_fallthru
                _
              // Predicated region
              $region79: #{pcn_forward.1} parent=55 // pred_check
                _
              $region80: #{pcn_forward.1} parent=55 // pred_check_branch
                %1172 = sbr.rel target = $region82
              $region81: #{pcn_forward.1} parent=55 // pred_region
                _
              $region82: #{pcn_forward.1} parent=55 // pred_fallthru
                _
            $region56: #{pcn_forward.1} parent=51 // pred_fallthru
              _
            // Predicated region
            $region57: #{pcn_forward.1} parent=51 // pred_check
              _
            $region58: #{pcn_forward.1} parent=51 // pred_check_branch
              %1134 = sbr.rel target = $region60
            $region59: #{pcn_forward.1} parent=51 // pred_region
              %s1136 = ssub.s32 256, 1
              loop: start=0, step=1, limit=1
              $region61: #{pcn_forward.1} parent=59 // loop_pre_header
                _
              $region62: #{pcn_forward.1} parent=59 // loop_header
                %s1138 = sphi 0, %s1142
                %p1139 = scmp.ge.s32.totalorder %s1138, 1
                %s1143 = sphi %s1121, %s1121
                %s1144 = sphi %s1128, %s1128
              $region63: #{pcn_forward.1} parent=59 // loop_header_branch
                %1141 = sbr.rel (%p1139) target = $region67
              $region64: #{pcn_forward.1} parent=59 // loop_body
                %v1145 = vld [vmem:[%s1143] sm:%s1136]
                %1146 = vst [vmem:[%s1144] sm:%s1136] %v1145
                %v1147 = vld [vmem:[%s1143 + $0x8] sm:%s1136]
                %1148 = vst [vmem:[%s1144 + $0x10] sm:%s1136] %v1147
                %v1149 = vld [vmem:[%s1143 + $0x10] sm:%s1136]
                %1150 = vst [vmem:[%s1144 + $0x20] sm:%s1136] %v1149
                %v1151 = vld [vmem:[%s1143 + $0x18] sm:%s1136]
                %1152 = vst [vmem:[%s1144 + $0x30] sm:%s1136] %v1151
              $region65: #{pcn_forward.1} parent=59 // loop_footer
                %s1142 = sadd.s32 1, %s1138
              $region66: #{pcn_forward.1} parent=59 // loop_footer_branch
                %1137 = sbr.rel target = $region62
              $region67: #{pcn_forward.1} parent=59 // loop_exit
                _
            $region60: #{pcn_forward.1} parent=51 // pred_fallthru
              _
          $region52: #{pcn_forward.1} parent=47 // pred_fallthru
            _
          %1173 = vnop
        $region48: #{pcn_forward.1} parent=39 // pred_fallthru
          _
      $region40: #{pcn_forward.1} parent=5 // pred_fallthru
        _
      %p1174 = scmp.le.s32.totalorder 2, %s11
      // Predicated region
      $region83: #{pcn_forward.1} parent=5 // pred_check
        %p1175 = pneg %p1174
      $region84: #{pcn_forward.1} parent=5 // pred_check_branch
        %1177 = sbr.rel (%p1175) target = $region86
      $region85: #{pcn_forward.1} parent=5 // pred_region
        %s1178 = ssub.s32 %s11, 2
        // Predicated region
        $region87: #{pcn_forward.1} parent=85 // pred_check
          %p1179 = pneg %p169
        $region88: #{pcn_forward.1} parent=85 // pred_check_branch
          %1181 = sbr.rel (%p1179) target = $region90
        $region89: #{pcn_forward.1} parent=85 // pred_region
          %s1182 = sand.u32 %s154, 1
          %s1183 = sand.u32 %s154, 1
          %s1184 = smul.addr %s1183, 32
          %s1185 = scalar_lea.vmem [#allocation4], %s1184
        $region90: #{pcn_forward.1} parent=85 // pred_fallthru
          _
      $region86: #{pcn_forward.1} parent=5 // pred_fallthru
        _
    $region6: #{pcn_forward.1} parent=1 // loop_footer
      %s15 = sadd.s32 1, %s11
    $region7: #{pcn_forward.1} parent=1 // loop_footer_branch
      %10 = sbr.rel target = $region3
    $region8: #{pcn_forward.1} parent=1 // loop_exit
      _

</llo_original>
